<compile_context>
chip_gen: v6e
topology: v6e:2x2x1
jax: 0.10.0
libtpu: 0.0.40
codegen_flags: <defaults>
</compile_context>

<pallas_src>
import functools
import math

import jax
import jax.numpy as jnp
from jax.experimental import pallas as pl
from jax.experimental.pallas import tpu as pltpu


def _round_up(n, m):
    return ((n + m - 1) // m) * m


def _gin_fused_kernel(*refs, num_layers, num_graphs, g_pad, d_pad):
    """Fused GIN_hybrid forward on full VMEM-resident blocks."""
    f32 = jnp.float32

    x_ref, m_ref = refs[0], refs[1]
    idx = 2
    layer_refs = []
    for _ in range(num_layers):
        layer_refs.append((refs[idx], refs[idx + 1]))
        idx += 2
    (p_sum_ref, inv_cnt_ref, mask_t_ref,
     w_max_ref, w_mean_ref, w_sum_ref, b_out_ref, out_ref) = refs[idx:idx + 8]

    m = m_ref[...]          # (I + A), padded   [n_pad, n_pad]
    h = x_ref[...]          # node features     [n_pad, f_pad]

    # GINConv stack: h <- relu( MLP( (I + A) @ h ) ), MLP = Lin -> ReLU -> Lin (no bias)
    for w1_ref, w2_ref in layer_refs:
        agg = jnp.dot(m, h, preferred_element_type=f32)
        t = jnp.maximum(jnp.dot(agg, w1_ref[...], preferred_element_type=f32), 0.0)
        h = jnp.dot(t, w2_ref[...], preferred_element_type=f32)
        h = jnp.maximum(h, 0.0)          # F.relu after the conv
        # Dropout: identity at inference (see TODO above).

    # Global pooling per graph (gadp via matmul, gap derived, gmp via masked max).
    sum_pool = jnp.dot(p_sum_ref[...], h, preferred_element_type=f32)   # [g_pad, d_pad]
    mean_pool = sum_pool * inv_cnt_ref[...]                              # [g_pad,1] bcast

    neg = jnp.float32(-1e30)
    rows = []
    for g in range(g_pad):               # static unroll; g_pad is tiny (multiple of 8)
        if g < num_graphs:
            col = mask_t_ref[:, g:g + 1]                     # [n_pad, 1]
            mg = jnp.where(col > 0.0, h, neg)
            rows.append(jnp.max(mg, axis=0, keepdims=True))  # [1, d_pad]
        else:
            rows.append(jnp.zeros((1, d_pad), f32))
    max_pool = jnp.concatenate(rows, axis=0)                 # [g_pad, d_pad]

    # cat([gmp, gap, gadp], dim=1) @ W_out  ==  sum of three block matmuls.
    out = (jnp.dot(max_pool, w_max_ref[...], preferred_element_type=f32)
           + jnp.dot(mean_pool, w_mean_ref[...], preferred_element_type=f32)
           + jnp.dot(sum_pool, w_sum_ref[...], preferred_element_type=f32)
           + b_out_ref[...])
    out_ref[...] = out.astype(out_ref.dtype)


def gin_hybrid_forward(x, edge_index, batch_index, num_graphs, params):
    """Fused Pallas forward. x:[N,F] f32, edge_index:[2,E] int32, batch_index:[N] int32."""
    f32 = jnp.float32
    LANE, SUB = 128, 8

    N, F = x.shape
    gin_params = params["gin"]                 # list of (W1[in,emb], W2[emb,emb])
    w_out, b_out = params["out"]               # [3*emb, dense], [dense]
    emb = gin_params[0][0].shape[1]
    dense = w_out.shape[1]
    num_layers = len(gin_params)

    n_pad = _round_up(max(N, SUB), LANE)       # N is also a lane (contraction) dim of M/P
    f_pad = _round_up(F, LANE)
    d_pad = _round_up(emb, LANE)
    dense_pad = _round_up(dense, LANE)
    g_pad = _round_up(max(num_graphs, 1), SUB)
    g_lane = _round_up(max(num_graphs, 1), LANE)

    src, dst = edge_index[0], edge_index[1]

    # Message-passing operator M = I + A with A[dst, src] += 1 (PyG GINConv, eps=0).
    m = jnp.zeros((n_pad, n_pad), f32)
    m = m.at[jnp.arange(N), jnp.arange(N)].set(1.0)
    m = m.at[dst, src].add(1.0)

    x_p = jnp.zeros((n_pad, f_pad), f32).at[:N, :F].set(x.astype(f32))

    # Pooling operators (built once, VMEM-resident in the kernel).
    one_hot = (batch_index[None, :] == jnp.arange(num_graphs, dtype=jnp.int32)[:, None]
               ).astype(f32)                                   # [G, N]
    counts = jnp.maximum(one_hot.sum(axis=1, keepdims=True), 1.0)
    p_sum = jnp.zeros((g_pad, n_pad), f32).at[:num_graphs, :N].set(one_hot)
    inv_cnt = jnp.zeros((g_pad, 1), f32).at[:num_graphs, :].set(1.0 / counts)
    mask_t = jnp.zeros((n_pad, g_lane), f32).at[:N, :num_graphs].set(one_hot.T)

    # Zero-pad weights to 128-lane multiples (zero rows/cols contribute nothing).
    padded_layers = []
    in_real, in_pad = F, f_pad
    for (w1, w2) in gin_params:
        w1_p = jnp.zeros((in_pad, d_pad), f32).at[:in_real, :emb].set(w1)
        w2_p = jnp.zeros((d_pad, d_pad), f32).at[:emb, :emb].set(w2)
        padded_layers.append((w1_p, w2_p))
        in_real, in_pad = emb, d_pad

    # Split the readout weight into the three [max | mean | add] row blocks.
    w_blocks = []
    for k in range(3):
        wb = jnp.zeros((d_pad, dense_pad), f32).at[:emb, :dense].set(
            w_out[k * emb:(k + 1) * emb, :])
        w_blocks.append(wb)
    b_out_p = jnp.zeros((1, dense_pad), f32).at[0, :dense].set(b_out)

    inputs = [x_p, m]
    for w1_p, w2_p in padded_layers:
        inputs.extend([w1_p, w2_p])
    inputs.extend([p_sum, inv_cnt, mask_t, w_blocks[0], w_blocks[1], w_blocks[2], b_out_p])

    # Advisory cost estimate for XLA scheduling.
    flops = 0
    din = f_pad
    for _ in range(num_layers):
        flops += 2 * n_pad * n_pad * din       # (I+A) @ h
        flops += 2 * n_pad * din * d_pad       # @ W1
        flops += 2 * n_pad * d_pad * d_pad     # @ W2
        din = d_pad
    flops += 2 * g_pad * n_pad * d_pad         # sum pooling matmul
    flops += 3 * 2 * g_pad * d_pad * dense_pad # readout (3 block matmuls)
    bytes_accessed = sum(int(a.size) * 4 for a in inputs) + g_pad * dense_pad * 4

    vmem_spec = pl.BlockSpec(memory_space=pltpu.MemorySpace.VMEM)
    kernel = functools.partial(
        _gin_fused_kernel,
        num_layers=num_layers,
        num_graphs=num_graphs,
        g_pad=g_pad,
        d_pad=d_pad,
    )

    out_p = pl.pallas_call(
        kernel,
        out_shape=jax.ShapeDtypeStruct((g_pad, dense_pad), f32),
        in_specs=[vmem_spec] * len(inputs),
        out_specs=vmem_spec,
        cost_estimate=pl.CostEstimate(
            flops=int(flops), transcendentals=0, bytes_accessed=int(bytes_accessed)),
    )(*inputs)

    return out_p[:num_graphs, :dense]


def make_gin_hybrid_params(key, feature_size, model_params):
    """Shapes match GIN_hybrid.__init__ (weights stored as [in, out])."""
    emb = model_params["embedding_size"]
    dense = model_params["dense_neuron"]
    num_gin_layers = model_params["num_gin_layers"]

    def uniform_w(k, din, dout):
        bound = 1.0 / math.sqrt(din)
        return jax.random.uniform(k, (din, dout), jnp.float32, -bound, bound)

    gin = []
    in_dim = feature_size
    for _ in range(num_gin_layers):            # initial_conv + (num_gin_layers-1) gin_layers
        key, k1, k2 = jax.random.split(key, 3)
        gin.append((uniform_w(k1, in_dim, emb), uniform_w(k2, emb, emb)))
        in_dim = emb

    key, kw, kb = jax.random.split(key, 3)
    bound = 1.0 / math.sqrt(3 * emb)
    w_out = jax.random.uniform(kw, (3 * emb, dense), jnp.float32, -bound, bound)
    b_out = jax.random.uniform(kb, (dense,), jnp.float32, -bound, bound)
    return {"gin": gin, "out": (w_out, b_out)}


def reference_forward(x, edge_index, batch_index, num_graphs, params):
    """Pure-JAX reference with scatter-based GIN aggregation."""
    hdot = functools.partial(jnp.matmul, precision=jax.lax.Precision.HIGHEST)
    src, dst = edge_index[0], edge_index[1]
    h = x.astype(jnp.float32)
    for w1, w2 in params["gin"]:
        agg = jnp.zeros_like(h).at[dst].add(h[src])      # sum over incoming edges
        z = h + agg                                      # eps = 0
        h = hdot(jnp.maximum(hdot(z, w1), 0.0), w2)      # Linear->ReLU->Linear (no bias)
        h = jnp.maximum(h, 0.0)                          # F.relu; dropout = identity
    one_hot = (batch_index[None, :] == jnp.arange(num_graphs, dtype=jnp.int32)[:, None]
               ).astype(jnp.float32)
    sum_pool = hdot(one_hot, h)
    mean_pool = sum_pool / jnp.maximum(one_hot.sum(axis=1, keepdims=True), 1.0)
    masked = jnp.where(one_hot[:, :, None] > 0, h[None, :, :], -jnp.inf)
    max_pool = masked.max(axis=1)
    pooled = jnp.concatenate([max_pool, mean_pool, sum_pool], axis=1)
    w_out, b_out = params["out"]
    return hdot(pooled, w_out) + b_out[None, :]


if __name__ == "__main__":
    key = jax.random.PRNGKey(0)
    k_x, k_e, k_p = jax.random.split(key, 3)

    feature_size = 16
    model_params = {
        "embedding_size": 32,
        "dense_neuron": 64,
        "num_gin_layers": 2,
        "dropout_value": 0.2,
    }

    num_nodes = 20
    num_edges = 48
    num_graphs = 3

    x = jax.random.normal(k_x, (num_nodes, feature_size), jnp.float32)
    edge_index = jax.random.randint(k_e, (2, num_edges), 0, num_nodes, dtype=jnp.int32)
    batch_index = jnp.concatenate([
        jnp.full((7,), 0, jnp.int32),
        jnp.full((7,), 1, jnp.int32),
        jnp.full((6,), 2, jnp.int32),
    ])

    params = make_gin_hybrid_params(k_p, feature_size, model_params)

    out = gin_hybrid_forward(x, edge_index, batch_index, num_graphs, params)
    out = jax.block_until_ready(out)

    ref = reference_forward(x, edge_index, batch_index, num_graphs, params)
    assert out.shape == (num_graphs, model_params["dense_neuron"]), out.shape
    assert jnp.allclose(out, ref, atol=1e-3, rtol=1e-3), (
        "mismatch vs reference, max abs diff = %e" % float(jnp.max(jnp.abs(out - ref))))

    print("KERNEL_OK")
</pallas_src>

<mosaic_0001>
module attributes {stable_mosaic.version = 11 : i64} {
  func.func @_gin_fused_kernel(%arg0: memref<128x128xf32, #tpu.memory_space<vmem>>, %arg1: memref<128x128xf32, #tpu.memory_space<vmem>>, %arg2: memref<128x128xf32, #tpu.memory_space<vmem>>, %arg3: memref<128x128xf32, #tpu.memory_space<vmem>>, %arg4: memref<128x128xf32, #tpu.memory_space<vmem>>, %arg5: memref<128x128xf32, #tpu.memory_space<vmem>>, %arg6: memref<8x128xf32, #tpu.memory_space<vmem>>, %arg7: memref<8x1xf32, #tpu.memory_space<vmem>>, %arg8: memref<128x128xf32, #tpu.memory_space<vmem>>, %arg9: memref<128x128xf32, #tpu.memory_space<vmem>>, %arg10: memref<128x128xf32, #tpu.memory_space<vmem>>, %arg11: memref<128x128xf32, #tpu.memory_space<vmem>>, %arg12: memref<1x128xf32, #tpu.memory_space<vmem>>, %arg13: memref<8x128xf32, #tpu.memory_space<vmem>>) attributes {dimension_semantics = [], scalar_prefetch = 0 : i64, scratch_operands = 0 : i64, tpu.core_type = #tpu.core_type<tc>} {
    %c0 = arith.constant 0 : index
    %c0_0 = arith.constant 0 : index
    %0 = vector.load %arg1[%c0, %c0_0] : memref<128x128xf32, #tpu.memory_space<vmem>>, vector<128x128xf32>
    %c0_1 = arith.constant 0 : index
    %c0_2 = arith.constant 0 : index
    %1 = vector.load %arg0[%c0_1, %c0_2] : memref<128x128xf32, #tpu.memory_space<vmem>>, vector<128x128xf32>
    %cst = arith.constant dense<0.000000e+00> : vector<128x128xf32>
    %2 = tpu.matmul %0, %1, %cst {dimension_numbers = #tpu.dot_dimension_numbers<[1], [0], [0], [1], [0, 0, 1, 1], [], []>} : vector<128x128xf32>, vector<128x128xf32>, vector<128x128xf32> -> vector<128x128xf32>
    %c0_3 = arith.constant 0 : index
    %c0_4 = arith.constant 0 : index
    %3 = vector.load %arg2[%c0_3, %c0_4] : memref<128x128xf32, #tpu.memory_space<vmem>>, vector<128x128xf32>
    %cst_5 = arith.constant dense<0.000000e+00> : vector<128x128xf32>
    %4 = tpu.matmul %2, %3, %cst_5 {dimension_numbers = #tpu.dot_dimension_numbers<[1], [0], [0], [1], [0, 0, 1, 1], [], []>} : vector<128x128xf32>, vector<128x128xf32>, vector<128x128xf32> -> vector<128x128xf32>
    %cst_6 = arith.constant 0.000000e+00 : f32
    %5 = vector.broadcast %cst_6 : f32 to vector<128x128xf32>
    %6 = arith.maximumf %4, %5 : vector<128x128xf32>
    %c0_7 = arith.constant 0 : index
    %c0_8 = arith.constant 0 : index
    %7 = vector.load %arg3[%c0_7, %c0_8] : memref<128x128xf32, #tpu.memory_space<vmem>>, vector<128x128xf32>
    %cst_9 = arith.constant dense<0.000000e+00> : vector<128x128xf32>
    %8 = tpu.matmul %6, %7, %cst_9 {dimension_numbers = #tpu.dot_dimension_numbers<[1], [0], [0], [1], [0, 0, 1, 1], [], []>} : vector<128x128xf32>, vector<128x128xf32>, vector<128x128xf32> -> vector<128x128xf32>
    %cst_10 = arith.constant 0.000000e+00 : f32
    %9 = vector.broadcast %cst_10 : f32 to vector<128x128xf32>
    %10 = arith.maximumf %8, %9 : vector<128x128xf32>
    %cst_11 = arith.constant dense<0.000000e+00> : vector<128x128xf32>
    %11 = tpu.matmul %0, %10, %cst_11 {dimension_numbers = #tpu.dot_dimension_numbers<[1], [0], [0], [1], [0, 0, 1, 1], [], []>} : vector<128x128xf32>, vector<128x128xf32>, vector<128x128xf32> -> vector<128x128xf32>
    %c0_12 = arith.constant 0 : index
    %c0_13 = arith.constant 0 : index
    %12 = vector.load %arg4[%c0_12, %c0_13] : memref<128x128xf32, #tpu.memory_space<vmem>>, vector<128x128xf32>
    %cst_14 = arith.constant dense<0.000000e+00> : vector<128x128xf32>
    %13 = tpu.matmul %11, %12, %cst_14 {dimension_numbers = #tpu.dot_dimension_numbers<[1], [0], [0], [1], [0, 0, 1, 1], [], []>} : vector<128x128xf32>, vector<128x128xf32>, vector<128x128xf32> -> vector<128x128xf32>
    %cst_15 = arith.constant 0.000000e+00 : f32
    %14 = vector.broadcast %cst_15 : f32 to vector<128x128xf32>
    %15 = arith.maximumf %13, %14 : vector<128x128xf32>
    %c0_16 = arith.constant 0 : index
    %c0_17 = arith.constant 0 : index
    %16 = vector.load %arg5[%c0_16, %c0_17] : memref<128x128xf32, #tpu.memory_space<vmem>>, vector<128x128xf32>
    %cst_18 = arith.constant dense<0.000000e+00> : vector<128x128xf32>
    %17 = tpu.matmul %15, %16, %cst_18 {dimension_numbers = #tpu.dot_dimension_numbers<[1], [0], [0], [1], [0, 0, 1, 1], [], []>} : vector<128x128xf32>, vector<128x128xf32>, vector<128x128xf32> -> vector<128x128xf32>
    %cst_19 = arith.constant 0.000000e+00 : f32
    %18 = vector.broadcast %cst_19 : f32 to vector<128x128xf32>
    %19 = arith.maximumf %17, %18 : vector<128x128xf32>
    %c0_20 = arith.constant 0 : index
    %c0_21 = arith.constant 0 : index
    %20 = vector.load %arg6[%c0_20, %c0_21] : memref<8x128xf32, #tpu.memory_space<vmem>>, vector<8x128xf32>
    %cst_22 = arith.constant dense<0.000000e+00> : vector<8x128xf32>
    %21 = tpu.matmul %20, %19, %cst_22 {dimension_numbers = #tpu.dot_dimension_numbers<[1], [0], [0], [1], [0, 0, 1, 1], [], []>} : vector<8x128xf32>, vector<128x128xf32>, vector<8x128xf32> -> vector<8x128xf32>
    %c0_23 = arith.constant 0 : index
    %c0_24 = arith.constant 0 : index
    %22 = vector.load %arg7[%c0_23, %c0_24] : memref<8x1xf32, #tpu.memory_space<vmem>>, vector<8x1xf32>
    %23 = vector.broadcast %22 : vector<8x1xf32> to vector<8x128xf32>
    %24 = arith.mulf %21, %23 : vector<8x128xf32>
    %c0_25 = arith.constant 0 : index
    %c0_26 = arith.constant 0 : index
    %25 = vector.load %arg8[%c0_25, %c0_26] : memref<128x128xf32, #tpu.memory_space<vmem>>, vector<128x1xf32>
    %cst_27 = arith.constant 0.000000e+00 : f32
    %26 = vector.broadcast %cst_27 : f32 to vector<128x1xf32>
    %27 = arith.cmpf ogt, %25, %26 : vector<128x1xf32>
    %cst_28 = arith.constant -1.000000e+30 : f32
    %28 = vector.shape_cast %27 : vector<128x1xi1> to vector<128x1xi1>
    %29 = vector.broadcast %28 : vector<128x1xi1> to vector<128x128xi1>
    %30 = vector.broadcast %cst_28 : f32 to vector<128x128xf32>
    %31 = arith.select %29, %19, %30 : vector<128x128xi1>, vector<128x128xf32>
    %cst_29 = arith.constant dense<0xFF800000> : vector<128xf32>
    %32 = vector.multi_reduction <maximumf>, %31, %cst_29 [0] : vector<128x128xf32> to vector<128xf32>
    %33 = vector.shape_cast %32 : vector<128xf32> to vector<1x128xf32>
    %c0_30 = arith.constant 0 : index
    %c1 = arith.constant 1 : index
    %34 = vector.load %arg8[%c0_30, %c1] : memref<128x128xf32, #tpu.memory_space<vmem>>, vector<128x1xf32>
    %cst_31 = arith.constant 0.000000e+00 : f32
    %35 = vector.broadcast %cst_31 : f32 to vector<128x1xf32>
    %36 = arith.cmpf ogt, %34, %35 : vector<128x1xf32>
    %cst_32 = arith.constant -1.000000e+30 : f32
    %37 = vector.shape_cast %36 : vector<128x1xi1> to vector<128x1xi1>
    %38 = vector.broadcast %37 : vector<128x1xi1> to vector<128x128xi1>
    %39 = vector.broadcast %cst_32 : f32 to vector<128x128xf32>
    %40 = arith.select %38, %19, %39 : vector<128x128xi1>, vector<128x128xf32>
    %cst_33 = arith.constant dense<0xFF800000> : vector<128xf32>
    %41 = vector.multi_reduction <maximumf>, %40, %cst_33 [0] : vector<128x128xf32> to vector<128xf32>
    %42 = vector.shape_cast %41 : vector<128xf32> to vector<1x128xf32>
    %c0_34 = arith.constant 0 : index
    %c2 = arith.constant 2 : index
    %43 = vector.load %arg8[%c0_34, %c2] : memref<128x128xf32, #tpu.memory_space<vmem>>, vector<128x1xf32>
    %cst_35 = arith.constant 0.000000e+00 : f32
    %44 = vector.broadcast %cst_35 : f32 to vector<128x1xf32>
    %45 = arith.cmpf ogt, %43, %44 : vector<128x1xf32>
    %cst_36 = arith.constant -1.000000e+30 : f32
    %46 = vector.shape_cast %45 : vector<128x1xi1> to vector<128x1xi1>
    %47 = vector.broadcast %46 : vector<128x1xi1> to vector<128x128xi1>
    %48 = vector.broadcast %cst_36 : f32 to vector<128x128xf32>
    %49 = arith.select %47, %19, %48 : vector<128x128xi1>, vector<128x128xf32>
    %cst_37 = arith.constant dense<0xFF800000> : vector<128xf32>
    %50 = vector.multi_reduction <maximumf>, %49, %cst_37 [0] : vector<128x128xf32> to vector<128xf32>
    %51 = vector.shape_cast %50 : vector<128xf32> to vector<1x128xf32>
    %cst_38 = arith.constant 0.000000e+00 : f32
    %52 = vector.broadcast %cst_38 : f32 to vector<1x128xf32>
    %cst_39 = arith.constant 0.000000e+00 : f32
    %53 = vector.broadcast %cst_39 : f32 to vector<1x128xf32>
    %cst_40 = arith.constant 0.000000e+00 : f32
    %54 = vector.broadcast %cst_40 : f32 to vector<1x128xf32>
    %cst_41 = arith.constant 0.000000e+00 : f32
    %55 = vector.broadcast %cst_41 : f32 to vector<1x128xf32>
    %cst_42 = arith.constant 0.000000e+00 : f32
    %56 = vector.broadcast %cst_42 : f32 to vector<1x128xf32>
    %57 = tpu.concatenate %33, %42, %51, %52, %53, %54, %55, %56 in 0 : vector<1x128xf32>, vector<1x128xf32>, vector<1x128xf32>, vector<1x128xf32>, vector<1x128xf32>, vector<1x128xf32>, vector<1x128xf32>, vector<1x128xf32> -> vector<8x128xf32>
    %c0_43 = arith.constant 0 : index
    %c0_44 = arith.constant 0 : index
    %58 = vector.load %arg9[%c0_43, %c0_44] : memref<128x128xf32, #tpu.memory_space<vmem>>, vector<128x128xf32>
    %cst_45 = arith.constant dense<0.000000e+00> : vector<8x128xf32>
    %59 = tpu.matmul %57, %58, %cst_45 {dimension_numbers = #tpu.dot_dimension_numbers<[1], [0], [0], [1], [0, 0, 1, 1], [], []>} : vector<8x128xf32>, vector<128x128xf32>, vector<8x128xf32> -> vector<8x128xf32>
    %c0_46 = arith.constant 0 : index
    %c0_47 = arith.constant 0 : index
    %60 = vector.load %arg10[%c0_46, %c0_47] : memref<128x128xf32, #tpu.memory_space<vmem>>, vector<128x128xf32>
    %cst_48 = arith.constant dense<0.000000e+00> : vector<8x128xf32>
    %61 = tpu.matmul %24, %60, %cst_48 {dimension_numbers = #tpu.dot_dimension_numbers<[1], [0], [0], [1], [0, 0, 1, 1], [], []>} : vector<8x128xf32>, vector<128x128xf32>, vector<8x128xf32> -> vector<8x128xf32>
    %62 = arith.addf %59, %61 : vector<8x128xf32>
    %c0_49 = arith.constant 0 : index
    %c0_50 = arith.constant 0 : index
    %63 = vector.load %arg11[%c0_49, %c0_50] : memref<128x128xf32, #tpu.memory_space<vmem>>, vector<128x128xf32>
    %cst_51 = arith.constant dense<0.000000e+00> : vector<8x128xf32>
    %64 = tpu.matmul %21, %63, %cst_51 {dimension_numbers = #tpu.dot_dimension_numbers<[1], [0], [0], [1], [0, 0, 1, 1], [], []>} : vector<8x128xf32>, vector<128x128xf32>, vector<8x128xf32> -> vector<8x128xf32>
    %65 = arith.addf %62, %64 : vector<8x128xf32>
    %c0_52 = arith.constant 0 : index
    %c0_53 = arith.constant 0 : index
    %66 = vector.load %arg12[%c0_52, %c0_53] : memref<1x128xf32, #tpu.memory_space<vmem>>, vector<1x128xf32>
    %67 = vector.broadcast %66 : vector<1x128xf32> to vector<8x128xf32>
    %68 = arith.addf %65, %67 : vector<8x128xf32>
    %c0_54 = arith.constant 0 : index
    %c0_55 = arith.constant 0 : index
    %69 = vector.load %arg13[%c0_54, %c0_55] : memref<8x128xf32, #tpu.memory_space<vmem>>, vector<8x128xf32>
    tpu.vector_store %arg13[%c0_54, %c0_55], %68 {strides = array<i32>} : memref<8x128xf32, #tpu.memory_space<vmem>>, vector<8x128xf32>,
    return
  }
}

</mosaic_0001>

<llo_original>
// kernel: tpu_custom_call.1
$region0: #{tpu_custom_call.1}
  #allocation0 [shape = 'u32[]', space=smem, size = 0x4, offset = 0x4, fixed_abs, tag = 'smem constant byte address 0x4 - core index']
  #allocation1 [shape = 'u32[144,128]{1,0:T(1,128)}', space=vmem, size = 0x12000, scoped, tag = 'internal scratch']
  %s0 = inlined_call_operand.hbm [shape: f32[128,128], index: 0, kind: input, shape index: {}]
  %s1 = inlined_call_operand.hbm [shape: f32[128,128], index: 1, kind: input, shape index: {}]
  %s2 = inlined_call_operand.hbm [shape: f32[128,128], index: 2, kind: input, shape index: {}]
  %s3 = inlined_call_operand.hbm [shape: f32[128,128], index: 3, kind: input, shape index: {}]
  %s4 = inlined_call_operand.hbm [shape: f32[128,128], index: 4, kind: input, shape index: {}]
  %s5 = inlined_call_operand.hbm [shape: f32[128,128], index: 5, kind: input, shape index: {}]
  %s6 = inlined_call_operand.vmem [shape: f32[8,128], index: 6, kind: input, shape index: {}]
  %s7 = inlined_call_operand.vmem [shape: f32[8,1], index: 7, kind: input, shape index: {}]
  %s8 = inlined_call_operand.hbm [shape: f32[128,128], index: 8, kind: input, shape index: {}]
  %s9 = inlined_call_operand.hbm [shape: f32[128,128], index: 9, kind: input, shape index: {}]
  %s10 = inlined_call_operand.hbm [shape: f32[128,128], index: 10, kind: input, shape index: {}]
  %s11 = inlined_call_operand.hbm [shape: f32[128,128], index: 11, kind: input, shape index: {}]
  %s12 = inlined_call_operand.vmem [shape: f32[1,128], index: 12, kind: input, shape index: {}]
  %s13 = inlined_call_operand.hbm [shape: f32[8,128], index: 13, kind: output, shape index: {}]
  %s14 = sld [smem:[#allocation0]]
  $region102: #{tpu_custom_call.1} parent=0
    _
  %s16 = ssub.s32 1, %s14
  %s17 = scalar_select 0, %s16, %s14
  $region1: #{tpu_custom_call.1} parent=0
    #allocation2 [shape = 'u8[65536]{0}', space=vmem, size = 0x10000, scoped, tag = 'input window, operand 0, single buffered']
    #allocation3 [shape = 's32[1]{0}', space=sflag, size = 0x4, scoped, tag = 'scoped memory for tpu_custom_call.1']
    #allocation4 [shape = 's32[1]{0}', space=sflag, size = 0x4, scoped, tag = 'scoped memory for tpu_custom_call.1']
    #allocation5 [shape = 'u8[65536]{0}', space=vmem, size = 0x10000, scoped, tag = 'input window, operand 1, single buffered']
    #allocation6 [shape = 's32[1]{0}', space=sflag, size = 0x4, scoped, tag = 'scoped memory for tpu_custom_call.1']
    #allocation7 [shape = 'u8[65536]{0}', space=vmem, size = 0x10000, scoped, tag = 'input window, operand 2, single buffered']
    #allocation8 [shape = 'u8[65536]{0}', space=vmem, size = 0x10000, scoped, tag = 'input window, operand 3, single buffered']
    #allocation9 [shape = 's32[1]{0}', space=sflag, size = 0x4, scoped, tag = 'scoped memory for tpu_custom_call.1']
    #allocation10 [shape = 'u8[65536]{0}', space=vmem, size = 0x10000, scoped, tag = 'input window, operand 4, single buffered']
    #allocation11 [shape = 'u8[65536]{0}', space=vmem, size = 0x10000, scoped, tag = 'input window, operand 5, single buffered']
    #allocation12 [shape = 's32[1]{0}', space=sflag, size = 0x4, scoped, tag = 'scoped memory for tpu_custom_call.1']
    #allocation13 [shape = 'u8[65536]{0}', space=vmem, size = 0x10000, scoped, tag = 'input window, operand 8, single buffered']
    #allocation14 [shape = 'u8[65536]{0}', space=vmem, size = 0x10000, scoped, tag = 'input window, operand 9, single buffered']
    #allocation15 [shape = 's32[1]{0}', space=sflag, size = 0x4, scoped, tag = 'scoped memory for tpu_custom_call.1']
    #allocation16 [shape = 'u8[65536]{0}', space=vmem, size = 0x10000, scoped, tag = 'input window, operand 10, single buffered']
    #allocation17 [shape = 'u8[65536]{0}', space=vmem, size = 0x10000, scoped, tag = 'input window, operand 11, single buffered']
    #allocation18 [shape = 's32[1]{0}', space=sflag, size = 0x4, scoped, tag = 'scoped memory for tpu_custom_call.1']
    #allocation19 [shape = 'u8[4096]{0}', space=vmem, size = 0x1000, scoped, tag = 'output window, operand 0, single buffered']
    %18 = vsyncpa [#allocation3], 0
    %19 = vsyncpa [#allocation6], 0
    %20 = vsyncpa [#allocation9], 0
    %21 = vsyncpa [#allocation12], 0
    %22 = vsyncpa [#allocation15], 0
    %23 = vsyncpa [#allocation18], 0
    %24 = vsyncpa [#allocation4], 0
    // Predicated region
    $region2: #{tpu_custom_call.1} parent=1 // pred_check
      _
    $region3: #{tpu_custom_call.1} parent=1 // pred_check_branch
      %26 = sbr.rel (0) target = $region5
    $region4: #{tpu_custom_call.1} parent=1 // pred_region
      %s28 = ssub.s32 2048, 2048
      %29 = vsyncadd [#allocation3], %s28
      %s30 = sshll.u32 [#allocation2], 4
      %s31 = int_to_ptr.vmem [resolvable:$true] %s30
      %36 = dma.hbm_to_vmem [thread:$0]  %s0, 2048, %s31, [#allocation3], 128, 128, 8
    $region5: #{tpu_custom_call.1} parent=1 // pred_fallthru
      _
    // Predicated region
    $region6: #{tpu_custom_call.1} parent=1 // pred_check
      _
    $region7: #{tpu_custom_call.1} parent=1 // pred_check_branch
      %38 = sbr.rel (0) target = $region9
    $region8: #{tpu_custom_call.1} parent=1 // pred_region
      %s40 = ssub.s32 2048, 2048
      %41 = vsyncadd [#allocation6], %s40
      %s42 = sshll.u32 [#allocation5], 4
      %s43 = int_to_ptr.vmem [resolvable:$true] %s42
      %48 = dma.hbm_to_vmem [thread:$0]  %s1, 2048, %s43, [#allocation6], 128, 128, 8
    $region9: #{tpu_custom_call.1} parent=1 // pred_fallthru
      _
    // Predicated region
    $region10: #{tpu_custom_call.1} parent=1 // pred_check
      _
    $region11: #{tpu_custom_call.1} parent=1 // pred_check_branch
      %50 = sbr.rel (0) target = $region13
    $region12: #{tpu_custom_call.1} parent=1 // pred_region
      %s52 = ssub.s32 2048, 2048
      %53 = vsyncadd [#allocation6], %s52
      %s54 = sshll.u32 [#allocation7], 4
      %s55 = int_to_ptr.vmem [resolvable:$true] %s54
      %60 = dma.hbm_to_vmem [thread:$0]  %s2, 2048, %s55, [#allocation6], 128, 128, 8
    $region13: #{tpu_custom_call.1} parent=1 // pred_fallthru
      _
    // Predicated region
    $region14: #{tpu_custom_call.1} parent=1 // pred_check
      _
    $region15: #{tpu_custom_call.1} parent=1 // pred_check_branch
      %62 = sbr.rel (0) target = $region17
    $region16: #{tpu_custom_call.1} parent=1 // pred_region
      %s64 = ssub.s32 2048, 2048
      %65 = vsyncadd [#allocation9], %s64
      %s66 = sshll.u32 [#allocation8], 4
      %s67 = int_to_ptr.vmem [resolvable:$true] %s66
      %72 = dma.hbm_to_vmem [thread:$0]  %s3, 2048, %s67, [#allocation9], 128, 128, 8
    $region17: #{tpu_custom_call.1} parent=1 // pred_fallthru
      _
    // Predicated region
    $region18: #{tpu_custom_call.1} parent=1 // pred_check
      _
    $region19: #{tpu_custom_call.1} parent=1 // pred_check_branch
      %74 = sbr.rel (0) target = $region21
    $region20: #{tpu_custom_call.1} parent=1 // pred_region
      %s76 = ssub.s32 2048, 2048
      %77 = vsyncadd [#allocation9], %s76
      %s78 = sshll.u32 [#allocation10], 4
      %s79 = int_to_ptr.vmem [resolvable:$true] %s78
      %84 = dma.hbm_to_vmem [thread:$0]  %s4, 2048, %s79, [#allocation9], 128, 128, 8
    $region21: #{tpu_custom_call.1} parent=1 // pred_fallthru
      _
    // Predicated region
    $region22: #{tpu_custom_call.1} parent=1 // pred_check
      _
    $region23: #{tpu_custom_call.1} parent=1 // pred_check_branch
      %86 = sbr.rel (0) target = $region25
    $region24: #{tpu_custom_call.1} parent=1 // pred_region
      %s88 = ssub.s32 2048, 2048
      %89 = vsyncadd [#allocation12], %s88
      %s90 = sshll.u32 [#allocation11], 4
      %s91 = int_to_ptr.vmem [resolvable:$true] %s90
      %96 = dma.hbm_to_vmem [thread:$0]  %s5, 2048, %s91, [#allocation12], 128, 128, 8
    $region25: #{tpu_custom_call.1} parent=1 // pred_fallthru
      _
    // Predicated region
    $region26: #{tpu_custom_call.1} parent=1 // pred_check
      _
    $region27: #{tpu_custom_call.1} parent=1 // pred_check_branch
      %98 = sbr.rel (0) target = $region29
    $region28: #{tpu_custom_call.1} parent=1 // pred_region
      _
    $region29: #{tpu_custom_call.1} parent=1 // pred_fallthru
      _
    // Predicated region
    $region30: #{tpu_custom_call.1} parent=1 // pred_check
      _
    $region31: #{tpu_custom_call.1} parent=1 // pred_check_branch
      %100 = sbr.rel (0) target = $region33
    $region32: #{tpu_custom_call.1} parent=1 // pred_region
      _
    $region33: #{tpu_custom_call.1} parent=1 // pred_fallthru
      _
    // Predicated region
    $region34: #{tpu_custom_call.1} parent=1 // pred_check
      _
    $region35: #{tpu_custom_call.1} parent=1 // pred_check_branch
      %102 = sbr.rel (0) target = $region37
    $region36: #{tpu_custom_call.1} parent=1 // pred_region
      %s104 = ssub.s32 2048, 2048
      %105 = vsyncadd [#allocation12], %s104
      %s106 = sshll.u32 [#allocation13], 4
      %s107 = int_to_ptr.vmem [resolvable:$true] %s106
      %112 = dma.hbm_to_vmem [thread:$0]  %s8, 2048, %s107, [#allocation12], 128, 128, 8
    $region37: #{tpu_custom_call.1} parent=1 // pred_fallthru
      _
    // Predicated region
    $region38: #{tpu_custom_call.1} parent=1 // pred_check
      _
    $region39: #{tpu_custom_call.1} parent=1 // pred_check_branch
      %114 = sbr.rel (0) target = $region41
    $region40: #{tpu_custom_call.1} parent=1 // pred_region
      %s116 = ssub.s32 2048, 2048
      %117 = vsyncadd [#allocation15], %s116
      %s118 = sshll.u32 [#allocation14], 4
      %s119 = int_to_ptr.vmem [resolvable:$true] %s118
      %124 = dma.hbm_to_vmem [thread:$0]  %s9, 2048, %s119, [#allocation15], 128, 128, 8
    $region41: #{tpu_custom_call.1} parent=1 // pred_fallthru
      _
    // Predicated region
    $region42: #{tpu_custom_call.1} parent=1 // pred_check
      _
    $region43: #{tpu_custom_call.1} parent=1 // pred_check_branch
      %126 = sbr.rel (0) target = $region45
    $region44: #{tpu_custom_call.1} parent=1 // pred_region
      %s128 = ssub.s32 2048, 2048
      %129 = vsyncadd [#allocation15], %s128
      %s130 = sshll.u32 [#allocation16], 4
      %s131 = int_to_ptr.vmem [resolvable:$true] %s130
      %136 = dma.hbm_to_vmem [thread:$0]  %s10, 2048, %s131, [#allocation15], 128, 128, 8
    $region45: #{tpu_custom_call.1} parent=1 // pred_fallthru
      _
    // Predicated region
    $region46: #{tpu_custom_call.1} parent=1 // pred_check
      _
    $region47: #{tpu_custom_call.1} parent=1 // pred_check_branch
      %138 = sbr.rel (0) target = $region49
    $region48: #{tpu_custom_call.1} parent=1 // pred_region
      %s140 = ssub.s32 2048, 2048
      %141 = vsyncadd [#allocation18], %s140
      %s142 = sshll.u32 [#allocation17], 4
      %s143 = int_to_ptr.vmem [resolvable:$true] %s142
      %148 = dma.hbm_to_vmem [thread:$0]  %s11, 2048, %s143, [#allocation18], 128, 128, 8
    $region49: #{tpu_custom_call.1} parent=1 // pred_fallthru
      _
    // Predicated region
    $region50: #{tpu_custom_call.1} parent=1 // pred_check
      _
    $region51: #{tpu_custom_call.1} parent=1 // pred_check_branch
      %150 = sbr.rel (0) target = $region53
    $region52: #{tpu_custom_call.1} parent=1 // pred_region
      _
    $region53: #{tpu_custom_call.1} parent=1 // pred_fallthru
      _
    // Predicated region
    $region54: #{tpu_custom_call.1} parent=1 // pred_check
      _
    $region55: #{tpu_custom_call.1} parent=1 // pred_check_branch
      %152 = sbr.rel (0) target = $region57
    $region56: #{tpu_custom_call.1} parent=1 // pred_region
      %153 = dma.done [#allocation3], 2048
    $region57: #{tpu_custom_call.1} parent=1 // pred_fallthru
      _
    // Predicated region
    $region58: #{tpu_custom_call.1} parent=1 // pred_check
      _
    $region59: #{tpu_custom_call.1} parent=1 // pred_check_branch
      %155 = sbr.rel (0) target = $region61
    $region60: #{tpu_custom_call.1} parent=1 // pred_region
      %156 = dma.done [#allocation6], 2048
    $region61: #{tpu_custom_call.1} parent=1 // pred_fallthru
      _
    // Predicated region
    $region62: #{tpu_custom_call.1} parent=1 // pred_check
      _
    $region63: #{tpu_custom_call.1} parent=1 // pred_check_branch
      %158 = sbr.rel (0) target = $region65
    $region64: #{tpu_custom_call.1} parent=1 // pred_region
      %159 = dma.done [#allocation6], 2048
    $region65: #{tpu_custom_call.1} parent=1 // pred_fallthru
      _
    // Predicated region
    $region66: #{tpu_custom_call.1} parent=1 // pred_check
      _
    $region67: #{tpu_custom_call.1} parent=1 // pred_check_branch
      %161 = sbr.rel (0) target = $region69
    $region68: #{tpu_custom_call.1} parent=1 // pred_region
      %162 = dma.done [#allocation9], 2048
    $region69: #{tpu_custom_call.1} parent=1 // pred_fallthru
      _
    // Predicated region
    $region70: #{tpu_custom_call.1} parent=1 // pred_check
      _
    $region71: #{tpu_custom_call.1} parent=1 // pred_check_branch
      %164 = sbr.rel (0) target = $region73
    $region72: #{tpu_custom_call.1} parent=1 // pred_region
      %165 = dma.done [#allocation9], 2048
    $region73: #{tpu_custom_call.1} parent=1 // pred_fallthru
      _
    // Predicated region
    $region74: #{tpu_custom_call.1} parent=1 // pred_check
      _
    $region75: #{tpu_custom_call.1} parent=1 // pred_check_branch
      %167 = sbr.rel (0) target = $region77
    $region76: #{tpu_custom_call.1} parent=1 // pred_region
      %168 = dma.done [#allocation12], 2048
    $region77: #{tpu_custom_call.1} parent=1 // pred_fallthru
      _
    // Predicated region
    $region78: #{tpu_custom_call.1} parent=1 // pred_check
      _
    $region79: #{tpu_custom_call.1} parent=1 // pred_check_branch
      %170 = sbr.rel (0) target = $region81
    $region80: #{tpu_custom_call.1} parent=1 // pred_region
      %171 = dma.done [#allocation12], 2048
    $region81: #{tpu_custom_call.1} parent=1 // pred_fallthru
      _
    // Predicated region
    $region82: #{tpu_custom_call.1} parent=1 // pred_check
      _
    $region83: #{tpu_custom_call.1} parent=1 // pred_check_branch
      %173 = sbr.rel (0) target = $region85
    $region84: #{tpu_custom_call.1} parent=1 // pred_region
      %174 = dma.done [#allocation15], 2048
    $region85: #{tpu_custom_call.1} parent=1 // pred_fallthru
      _
    // Predicated region
    $region86: #{tpu_custom_call.1} parent=1 // pred_check
      _
    $region87: #{tpu_custom_call.1} parent=1 // pred_check_branch
      %176 = sbr.rel (0) target = $region89
    $region88: #{tpu_custom_call.1} parent=1 // pred_region
      %177 = dma.done [#allocation15], 2048
    $region89: #{tpu_custom_call.1} parent=1 // pred_fallthru
      _
    // Predicated region
    $region90: #{tpu_custom_call.1} parent=1 // pred_check
      _
    $region91: #{tpu_custom_call.1} parent=1 // pred_check_branch
      %179 = sbr.rel (0) target = $region93
    $region92: #{tpu_custom_call.1} parent=1 // pred_region
      %180 = dma.done [#allocation18], 2048
    $region93: #{tpu_custom_call.1} parent=1 // pred_fallthru
      _
    %v181 = vld [vmem:[#allocation5] sm:$0xff]
    %v182 = vld [vmem:[#allocation5 + $0x8] sm:$0xff]
    %v183 = vld [vmem:[#allocation5 + $0x10] sm:$0xff]
    %v184 = vld [vmem:[#allocation5 + $0x18] sm:$0xff]
    %v185 = vld [vmem:[#allocation5 + $0x20] sm:$0xff]
    %v186 = vld [vmem:[#allocation5 + $0x28] sm:$0xff]
    %v187 = vld [vmem:[#allocation5 + $0x30] sm:$0xff]
    %v188 = vld [vmem:[#allocation5 + $0x38] sm:$0xff]
    %v189 = vld [vmem:[#allocation5 + $0x40] sm:$0xff]
    %v190 = vld [vmem:[#allocation5 + $0x48] sm:$0xff]
    %v191 = vld [vmem:[#allocation5 + $0x50] sm:$0xff]
    %v192 = vld [vmem:[#allocation5 + $0x58] sm:$0xff]
    %v193 = vld [vmem:[#allocation5 + $0x60] sm:$0xff]
    %v194 = vld [vmem:[#allocation5 + $0x68] sm:$0xff]
    %v195 = vld [vmem:[#allocation5 + $0x70] sm:$0xff]
    %v196 = vld [vmem:[#allocation5 + $0x78] sm:$0xff]
    %v197 = vld [vmem:[#allocation2] sm:$0xff]
    %v198 = vld [vmem:[#allocation2 + $0x8] sm:$0xff]
    %v199 = vld [vmem:[#allocation2 + $0x10] sm:$0xff]
    %v200 = vld [vmem:[#allocation2 + $0x18] sm:$0xff]
    %v201 = vld [vmem:[#allocation2 + $0x20] sm:$0xff]
    %v202 = vld [vmem:[#allocation2 + $0x28] sm:$0xff]
    %v203 = vld [vmem:[#allocation2 + $0x30] sm:$0xff]
    %v204 = vld [vmem:[#allocation2 + $0x38] sm:$0xff]
    %v205 = vld [vmem:[#allocation2 + $0x40] sm:$0xff]
    %v206 = vld [vmem:[#allocation2 + $0x48] sm:$0xff]
    %v207 = vld [vmem:[#allocation2 + $0x50] sm:$0xff]
    %v208 = vld [vmem:[#allocation2 + $0x58] sm:$0xff]
    %v209 = vld [vmem:[#allocation2 + $0x60] sm:$0xff]
    %v210 = vld [vmem:[#allocation2 + $0x68] sm:$0xff]
    %v211 = vld [vmem:[#allocation2 + $0x70] sm:$0xff]
    %v212 = vld [vmem:[#allocation2 + $0x78] sm:$0xff]
    %213 = vmatprep.subr.mxu0 0.0
    %214 = vmatpush1.msra.mxu0 %v212
    %215 = vmatprep.subr.mxu0 0.0
    %216 = vmatpush1.msra.mxu0 %v211
    %217 = vmatprep.subr.mxu0 0.0
    %218 = vmatpush1.msra.mxu0 %v210
    %219 = vmatprep.subr.mxu0 0.0
    %220 = vmatpush1.msra.mxu0 %v209
    %221 = vmatprep.subr.mxu0 0.0
    %222 = vmatpush1.msra.mxu0 %v208
    %223 = vmatprep.subr.mxu0 0.0
    %224 = vmatpush1.msra.mxu0 %v207
    %225 = vmatprep.subr.mxu0 0.0
    %226 = vmatpush1.msra.mxu0 %v206
    %227 = vmatprep.subr.mxu0 0.0
    %228 = vmatpush1.msra.mxu0 %v205
    %229 = vmatprep.subr.mxu0 0.0
    %230 = vmatpush1.msra.mxu0 %v204
    %231 = vmatprep.subr.mxu0 0.0
    %232 = vmatpush1.msra.mxu0 %v203
    %233 = vmatprep.subr.mxu0 0.0
    %234 = vmatpush1.msra.mxu0 %v202
    %235 = vmatprep.subr.mxu0 0.0
    %236 = vmatpush1.msra.mxu0 %v201
    %237 = vmatprep.subr.mxu0 0.0
    %238 = vmatpush1.msra.mxu0 %v200
    %239 = vmatprep.subr.mxu0 0.0
    %240 = vmatpush1.msra.mxu0 %v199
    %241 = vmatprep.subr.mxu0 0.0
    %242 = vmatpush1.msra.mxu0 %v198
    %243 = vmatprep.subr.mxu0 0.0
    %244 = vmatpush1.msra.mxu0 %v197
    %245 = vmatprep.subr.mxu0 0.0
    %246 = vmatpush2.msra.mxu0 0.0
    %247 = vmatprep.subr.mxu0 0.0
    %248 = vmatpush2.msra.mxu0 0.0
    %249 = vmatprep.subr.mxu0 0.0
    %250 = vmatpush2.msra.mxu0 0.0
    %251 = vmatprep.subr.mxu0 0.0
    %252 = vmatpush2.msra.mxu0 0.0
    %253 = vmatprep.subr.mxu0 0.0
    %254 = vmatpush2.msra.mxu0 0.0
    %255 = vmatprep.subr.mxu0 0.0
    %256 = vmatpush2.msra.mxu0 0.0
    %257 = vmatprep.subr.mxu0 0.0
    %258 = vmatpush2.msra.mxu0 0.0
    %259 = vmatprep.subr.mxu0 0.0
    %260 = vmatpush2.msra.mxu0 0.0
    %261 = vmatprep.subr.mxu0 0.0
    %262 = vmatpush2.msra.mxu0 0.0
    %263 = vmatprep.subr.mxu0 0.0
    %264 = vmatpush2.msra.mxu0 0.0
    %265 = vmatprep.subr.mxu0 0.0
    %266 = vmatpush2.msra.mxu0 0.0
    %267 = vmatprep.subr.mxu0 0.0
    %268 = vmatpush2.msra.mxu0 0.0
    %269 = vmatprep.subr.mxu0 0.0
    %270 = vmatpush2.msra.mxu0 0.0
    %271 = vmatprep.subr.mxu0 0.0
    %272 = vmatpush2.msra.mxu0 0.0
    %273 = vmatprep.subr.mxu0 0.0
    %274 = vmatpush2.msra.mxu0 0.0
    %275 = vmatprep.subr.mxu0 0.0
    %276 = vmatpush2.msra.mxu0 0.0
    %277 = vmatprep.mubr.f32.mxu0 0.0
    %278 = vmatmul.mubr.f32.gmra.mxu0 %v181
    %v279 = vpop.f32.mrf.mxu0
    %v280 = vadd.f32 0.0, %v279
    %v281 = vpop.f32.mrf.mxu0
    %282 = vmatprep.mubr.f32.mxu0 0.0
    %283 = vmatmul.mubr.f32.gmra.mxu0 %v182
    %v284 = vpop.f32.mrf.mxu0
    %v285 = vadd.f32 0.0, %v284
    %v286 = vpop.f32.mrf.mxu0
    %287 = vmatprep.mubr.f32.mxu0 0.0
    %288 = vmatmul.mubr.f32.gmra.mxu0 %v183
    %v289 = vpop.f32.mrf.mxu0
    %v290 = vadd.f32 0.0, %v289
    %v291 = vpop.f32.mrf.mxu0
    %292 = vmatprep.mubr.f32.mxu0 0.0
    %293 = vmatmul.mubr.f32.gmra.mxu0 %v184
    %v294 = vpop.f32.mrf.mxu0
    %v295 = vadd.f32 0.0, %v294
    %v296 = vpop.f32.mrf.mxu0
    %297 = vmatprep.mubr.f32.mxu0 0.0
    %298 = vmatmul.mubr.f32.gmra.mxu0 %v185
    %v299 = vpop.f32.mrf.mxu0
    %v300 = vadd.f32 0.0, %v299
    %v301 = vpop.f32.mrf.mxu0
    %302 = vmatprep.mubr.f32.mxu0 0.0
    %303 = vmatmul.mubr.f32.gmra.mxu0 %v186
    %v304 = vpop.f32.mrf.mxu0
    %v305 = vadd.f32 0.0, %v304
    %v306 = vpop.f32.mrf.mxu0
    %307 = vmatprep.mubr.f32.mxu0 0.0
    %308 = vmatmul.mubr.f32.gmra.mxu0 %v187
    %v309 = vpop.f32.mrf.mxu0
    %v310 = vadd.f32 0.0, %v309
    %v311 = vpop.f32.mrf.mxu0
    %312 = vmatprep.mubr.f32.mxu0 0.0
    %313 = vmatmul.mubr.f32.gmra.mxu0 %v188
    %v314 = vpop.f32.mrf.mxu0
    %v315 = vadd.f32 0.0, %v314
    %v316 = vpop.f32.mrf.mxu0
    %317 = vmatprep.mubr.f32.mxu0 0.0
    %318 = vmatmul.mubr.f32.gmra.mxu0 %v189
    %v319 = vpop.f32.mrf.mxu0
    %v320 = vadd.f32 0.0, %v319
    %v321 = vpop.f32.mrf.mxu0
    %322 = vmatprep.mubr.f32.mxu0 0.0
    %323 = vmatmul.mubr.f32.gmra.mxu0 %v190
    %v324 = vpop.f32.mrf.mxu0
    %v325 = vadd.f32 0.0, %v324
    %v326 = vpop.f32.mrf.mxu0
    %327 = vmatprep.mubr.f32.mxu0 0.0
    %328 = vmatmul.mubr.f32.gmra.mxu0 %v191
    %v329 = vpop.f32.mrf.mxu0
    %v330 = vadd.f32 0.0, %v329
    %v331 = vpop.f32.mrf.mxu0
    %332 = vmatprep.mubr.f32.mxu0 0.0
    %333 = vmatmul.mubr.f32.gmra.mxu0 %v192
    %v334 = vpop.f32.mrf.mxu0
    %v335 = vadd.f32 0.0, %v334
    %v336 = vpop.f32.mrf.mxu0
    %337 = vmatprep.mubr.f32.mxu0 0.0
    %338 = vmatmul.mubr.f32.gmra.mxu0 %v193
    %v339 = vpop.f32.mrf.mxu0
    %v340 = vadd.f32 0.0, %v339
    %v341 = vpop.f32.mrf.mxu0
    %342 = vmatprep.mubr.f32.mxu0 0.0
    %343 = vmatmul.mubr.f32.gmra.mxu0 %v194
    %v344 = vpop.f32.mrf.mxu0
    %v345 = vadd.f32 0.0, %v344
    %v346 = vpop.f32.mrf.mxu0
    %347 = vmatprep.mubr.f32.mxu0 0.0
    %348 = vmatmul.mubr.f32.gmra.mxu0 %v195
    %v349 = vpop.f32.mrf.mxu0
    %v350 = vadd.f32 0.0, %v349
    %v351 = vpop.f32.mrf.mxu0
    %352 = vmatprep.mubr.f32.mxu0 0.0
    %353 = vmatmul.mubr.f32.gmra.mxu0 %v196
    %v354 = vpop.f32.mrf.mxu0
    %v355 = vadd.f32 0.0, %v354
    %v356 = vpop.f32.mrf.mxu0
    %357 = vdwg.mxu0
    %v358 = vld [vmem:[#allocation7] sm:$0xff]
    %v359 = vld [vmem:[#allocation7 + $0x8] sm:$0xff]
    %v360 = vld [vmem:[#allocation7 + $0x10] sm:$0xff]
    %v361 = vld [vmem:[#allocation7 + $0x18] sm:$0xff]
    %v362 = vld [vmem:[#allocation7 + $0x20] sm:$0xff]
    %v363 = vld [vmem:[#allocation7 + $0x28] sm:$0xff]
    %v364 = vld [vmem:[#allocation7 + $0x30] sm:$0xff]
    %v365 = vld [vmem:[#allocation7 + $0x38] sm:$0xff]
    %v366 = vld [vmem:[#allocation7 + $0x40] sm:$0xff]
    %v367 = vld [vmem:[#allocation7 + $0x48] sm:$0xff]
    %v368 = vld [vmem:[#allocation7 + $0x50] sm:$0xff]
    %v369 = vld [vmem:[#allocation7 + $0x58] sm:$0xff]
    %v370 = vld [vmem:[#allocation7 + $0x60] sm:$0xff]
    %v371 = vld [vmem:[#allocation7 + $0x68] sm:$0xff]
    %v372 = vld [vmem:[#allocation7 + $0x70] sm:$0xff]
    %v373 = vld [vmem:[#allocation7 + $0x78] sm:$0xff]
    %374 = vmatprep.subr.mxu0 0.0
    %375 = vmatpush1.msra.mxu0 %v373
    %376 = vmatprep.subr.mxu0 0.0
    %377 = vmatpush1.msra.mxu0 %v372
    %378 = vmatprep.subr.mxu0 0.0
    %379 = vmatpush1.msra.mxu0 %v371
    %380 = vmatprep.subr.mxu0 0.0
    %381 = vmatpush1.msra.mxu0 %v370
    %382 = vmatprep.subr.mxu0 0.0
    %383 = vmatpush1.msra.mxu0 %v369
    %384 = vmatprep.subr.mxu0 0.0
    %385 = vmatpush1.msra.mxu0 %v368
    %386 = vmatprep.subr.mxu0 0.0
    %387 = vmatpush1.msra.mxu0 %v367
    %388 = vmatprep.subr.mxu0 0.0
    %389 = vmatpush1.msra.mxu0 %v366
    %390 = vmatprep.subr.mxu0 0.0
    %391 = vmatpush1.msra.mxu0 %v365
    %392 = vmatprep.subr.mxu0 0.0
    %393 = vmatpush1.msra.mxu0 %v364
    %394 = vmatprep.subr.mxu0 0.0
    %395 = vmatpush1.msra.mxu0 %v363
    %396 = vmatprep.subr.mxu0 0.0
    %397 = vmatpush1.msra.mxu0 %v362
    %398 = vmatprep.subr.mxu0 0.0
    %399 = vmatpush1.msra.mxu0 %v361
    %400 = vmatprep.subr.mxu0 0.0
    %401 = vmatpush1.msra.mxu0 %v360
    %402 = vmatprep.subr.mxu0 0.0
    %403 = vmatpush1.msra.mxu0 %v359
    %404 = vmatprep.subr.mxu0 0.0
    %405 = vmatpush1.msra.mxu0 %v358
    %406 = vmatprep.subr.mxu0 0.0
    %407 = vmatpush2.msra.mxu0 0.0
    %408 = vmatprep.subr.mxu0 0.0
    %409 = vmatpush2.msra.mxu0 0.0
    %410 = vmatprep.subr.mxu0 0.0
    %411 = vmatpush2.msra.mxu0 0.0
    %412 = vmatprep.subr.mxu0 0.0
    %413 = vmatpush2.msra.mxu0 0.0
    %414 = vmatprep.subr.mxu0 0.0
    %415 = vmatpush2.msra.mxu0 0.0
    %416 = vmatprep.subr.mxu0 0.0
    %417 = vmatpush2.msra.mxu0 0.0
    %418 = vmatprep.subr.mxu0 0.0
    %419 = vmatpush2.msra.mxu0 0.0
    %420 = vmatprep.subr.mxu0 0.0
    %421 = vmatpush2.msra.mxu0 0.0
    %422 = vmatprep.subr.mxu0 0.0
    %423 = vmatpush2.msra.mxu0 0.0
    %424 = vmatprep.subr.mxu0 0.0
    %425 = vmatpush2.msra.mxu0 0.0
    %426 = vmatprep.subr.mxu0 0.0
    %427 = vmatpush2.msra.mxu0 0.0
    %428 = vmatprep.subr.mxu0 0.0
    %429 = vmatpush2.msra.mxu0 0.0
    %430 = vmatprep.subr.mxu0 0.0
    %431 = vmatpush2.msra.mxu0 0.0
    %432 = vmatprep.subr.mxu0 0.0
    %433 = vmatpush2.msra.mxu0 0.0
    %434 = vmatprep.subr.mxu0 0.0
    %435 = vmatpush2.msra.mxu0 0.0
    %436 = vmatprep.subr.mxu0 0.0
    %437 = vmatpush2.msra.mxu0 0.0
    %438 = vmatprep.mubr.f32.mxu0 0.0
    %439 = vmatmul.mubr.f32.gmra.mxu0 %v280
    %v440 = vpop.f32.mrf.mxu0
    %v441 = vadd.f32 0.0, %v440
    %v442 = vpop.f32.mrf.mxu0
    %443 = vmatprep.mubr.f32.mxu0 0.0
    %444 = vmatmul.mubr.f32.gmra.mxu0 %v285
    %v445 = vpop.f32.mrf.mxu0
    %v446 = vadd.f32 0.0, %v445
    %v447 = vpop.f32.mrf.mxu0
    %448 = vmatprep.mubr.f32.mxu0 0.0
    %449 = vmatmul.mubr.f32.gmra.mxu0 %v290
    %v450 = vpop.f32.mrf.mxu0
    %v451 = vadd.f32 0.0, %v450
    %v452 = vpop.f32.mrf.mxu0
    %453 = vmatprep.mubr.f32.mxu0 0.0
    %454 = vmatmul.mubr.f32.gmra.mxu0 %v295
    %v455 = vpop.f32.mrf.mxu0
    %v456 = vadd.f32 0.0, %v455
    %v457 = vpop.f32.mrf.mxu0
    %458 = vmatprep.mubr.f32.mxu0 0.0
    %459 = vmatmul.mubr.f32.gmra.mxu0 %v300
    %v460 = vpop.f32.mrf.mxu0
    %v461 = vadd.f32 0.0, %v460
    %v462 = vpop.f32.mrf.mxu0
    %463 = vmatprep.mubr.f32.mxu0 0.0
    %464 = vmatmul.mubr.f32.gmra.mxu0 %v305
    %v465 = vpop.f32.mrf.mxu0
    %v466 = vadd.f32 0.0, %v465
    %v467 = vpop.f32.mrf.mxu0
    %468 = vmatprep.mubr.f32.mxu0 0.0
    %469 = vmatmul.mubr.f32.gmra.mxu0 %v310
    %v470 = vpop.f32.mrf.mxu0
    %v471 = vadd.f32 0.0, %v470
    %v472 = vpop.f32.mrf.mxu0
    %473 = vmatprep.mubr.f32.mxu0 0.0
    %474 = vmatmul.mubr.f32.gmra.mxu0 %v315
    %v475 = vpop.f32.mrf.mxu0
    %v476 = vadd.f32 0.0, %v475
    %v477 = vpop.f32.mrf.mxu0
    %478 = vmatprep.mubr.f32.mxu0 0.0
    %479 = vmatmul.mubr.f32.gmra.mxu0 %v320
    %v480 = vpop.f32.mrf.mxu0
    %v481 = vadd.f32 0.0, %v480
    %v482 = vpop.f32.mrf.mxu0
    %483 = vmatprep.mubr.f32.mxu0 0.0
    %484 = vmatmul.mubr.f32.gmra.mxu0 %v325
    %v485 = vpop.f32.mrf.mxu0
    %v486 = vadd.f32 0.0, %v485
    %v487 = vpop.f32.mrf.mxu0
    %488 = vmatprep.mubr.f32.mxu0 0.0
    %489 = vmatmul.mubr.f32.gmra.mxu0 %v330
    %v490 = vpop.f32.mrf.mxu0
    %v491 = vadd.f32 0.0, %v490
    %v492 = vpop.f32.mrf.mxu0
    %493 = vmatprep.mubr.f32.mxu0 0.0
    %494 = vmatmul.mubr.f32.gmra.mxu0 %v335
    %v495 = vpop.f32.mrf.mxu0
    %v496 = vadd.f32 0.0, %v495
    %v497 = vpop.f32.mrf.mxu0
    %498 = vmatprep.mubr.f32.mxu0 0.0
    %499 = vmatmul.mubr.f32.gmra.mxu0 %v340
    %v500 = vpop.f32.mrf.mxu0
    %v501 = vadd.f32 0.0, %v500
    %v502 = vpop.f32.mrf.mxu0
    %503 = vmatprep.mubr.f32.mxu0 0.0
    %504 = vmatmul.mubr.f32.gmra.mxu0 %v345
    %v505 = vpop.f32.mrf.mxu0
    %v506 = vadd.f32 0.0, %v505
    %v507 = vpop.f32.mrf.mxu0
    %508 = vmatprep.mubr.f32.mxu0 0.0
    %509 = vmatmul.mubr.f32.gmra.mxu0 %v350
    %v510 = vpop.f32.mrf.mxu0
    %v511 = vadd.f32 0.0, %v510
    %v512 = vpop.f32.mrf.mxu0
    %513 = vmatprep.mubr.f32.mxu0 0.0
    %514 = vmatmul.mubr.f32.gmra.mxu0 %v355
    %v515 = vpop.f32.mrf.mxu0
    %v516 = vadd.f32 0.0, %v515
    %v517 = vpop.f32.mrf.mxu0
    %518 = vdwg.mxu0
    %v519 = vmax.f32 %v441, 0.0
    %v520 = vmax.f32 %v446, 0.0
    %v521 = vmax.f32 %v451, 0.0
    %v522 = vmax.f32 %v456, 0.0
    %v523 = vmax.f32 %v461, 0.0
    %v524 = vmax.f32 %v466, 0.0
    %v525 = vmax.f32 %v471, 0.0
    %v526 = vmax.f32 %v476, 0.0
    %v527 = vmax.f32 %v481, 0.0
    %v528 = vmax.f32 %v486, 0.0
    %v529 = vmax.f32 %v491, 0.0
    %v530 = vmax.f32 %v496, 0.0
    %v531 = vmax.f32 %v501, 0.0
    %v532 = vmax.f32 %v506, 0.0
    %v533 = vmax.f32 %v511, 0.0
    %v534 = vmax.f32 %v516, 0.0
    %v535 = vld [vmem:[#allocation8] sm:$0xff]
    %v536 = vld [vmem:[#allocation8 + $0x8] sm:$0xff]
    %v537 = vld [vmem:[#allocation8 + $0x10] sm:$0xff]
    %v538 = vld [vmem:[#allocation8 + $0x18] sm:$0xff]
    %v539 = vld [vmem:[#allocation8 + $0x20] sm:$0xff]
    %v540 = vld [vmem:[#allocation8 + $0x28] sm:$0xff]
    %v541 = vld [vmem:[#allocation8 + $0x30] sm:$0xff]
    %v542 = vld [vmem:[#allocation8 + $0x38] sm:$0xff]
    %v543 = vld [vmem:[#allocation8 + $0x40] sm:$0xff]
    %v544 = vld [vmem:[#allocation8 + $0x48] sm:$0xff]
    %v545 = vld [vmem:[#allocation8 + $0x50] sm:$0xff]
    %v546 = vld [vmem:[#allocation8 + $0x58] sm:$0xff]
    %v547 = vld [vmem:[#allocation8 + $0x60] sm:$0xff]
    %v548 = vld [vmem:[#allocation8 + $0x68] sm:$0xff]
    %v549 = vld [vmem:[#allocation8 + $0x70] sm:$0xff]
    %v550 = vld [vmem:[#allocation8 + $0x78] sm:$0xff]
    %551 = vmatprep.subr.mxu0 0.0
    %552 = vmatpush1.msra.mxu0 %v550
    %553 = vmatprep.subr.mxu0 0.0
    %554 = vmatpush1.msra.mxu0 %v549
    %555 = vmatprep.subr.mxu0 0.0
    %556 = vmatpush1.msra.mxu0 %v548
    %557 = vmatprep.subr.mxu0 0.0
    %558 = vmatpush1.msra.mxu0 %v547
    %559 = vmatprep.subr.mxu0 0.0
    %560 = vmatpush1.msra.mxu0 %v546
    %561 = vmatprep.subr.mxu0 0.0
    %562 = vmatpush1.msra.mxu0 %v545
    %563 = vmatprep.subr.mxu0 0.0
    %564 = vmatpush1.msra.mxu0 %v544
    %565 = vmatprep.subr.mxu0 0.0
    %566 = vmatpush1.msra.mxu0 %v543
    %567 = vmatprep.subr.mxu0 0.0
    %568 = vmatpush1.msra.mxu0 %v542
    %569 = vmatprep.subr.mxu0 0.0
    %570 = vmatpush1.msra.mxu0 %v541
    %571 = vmatprep.subr.mxu0 0.0
    %572 = vmatpush1.msra.mxu0 %v540
    %573 = vmatprep.subr.mxu0 0.0
    %574 = vmatpush1.msra.mxu0 %v539
    %575 = vmatprep.subr.mxu0 0.0
    %576 = vmatpush1.msra.mxu0 %v538
    %577 = vmatprep.subr.mxu0 0.0
    %578 = vmatpush1.msra.mxu0 %v537
    %579 = vmatprep.subr.mxu0 0.0
    %580 = vmatpush1.msra.mxu0 %v536
    %581 = vmatprep.subr.mxu0 0.0
    %582 = vmatpush1.msra.mxu0 %v535
    %583 = vmatprep.subr.mxu0 0.0
    %584 = vmatpush2.msra.mxu0 0.0
    %585 = vmatprep.subr.mxu0 0.0
    %586 = vmatpush2.msra.mxu0 0.0
    %587 = vmatprep.subr.mxu0 0.0
    %588 = vmatpush2.msra.mxu0 0.0
    %589 = vmatprep.subr.mxu0 0.0
    %590 = vmatpush2.msra.mxu0 0.0
    %591 = vmatprep.subr.mxu0 0.0
    %592 = vmatpush2.msra.mxu0 0.0
    %593 = vmatprep.subr.mxu0 0.0
    %594 = vmatpush2.msra.mxu0 0.0
    %595 = vmatprep.subr.mxu0 0.0
    %596 = vmatpush2.msra.mxu0 0.0
    %597 = vmatprep.subr.mxu0 0.0
    %598 = vmatpush2.msra.mxu0 0.0
    %599 = vmatprep.subr.mxu0 0.0
    %600 = vmatpush2.msra.mxu0 0.0
    %601 = vmatprep.subr.mxu0 0.0
    %602 = vmatpush2.msra.mxu0 0.0
    %603 = vmatprep.subr.mxu0 0.0
    %604 = vmatpush2.msra.mxu0 0.0
    %605 = vmatprep.subr.mxu0 0.0
    %606 = vmatpush2.msra.mxu0 0.0
    %607 = vmatprep.subr.mxu0 0.0
    %608 = vmatpush2.msra.mxu0 0.0
    %609 = vmatprep.subr.mxu0 0.0
    %610 = vmatpush2.msra.mxu0 0.0
    %611 = vmatprep.subr.mxu0 0.0
    %612 = vmatpush2.msra.mxu0 0.0
    %613 = vmatprep.subr.mxu0 0.0
    %614 = vmatpush2.msra.mxu0 0.0
    %615 = vmatprep.mubr.f32.mxu0 0.0
    %616 = vmatmul.mubr.f32.gmra.mxu0 %v519
    %v617 = vpop.f32.mrf.mxu0
    %v618 = vadd.f32 0.0, %v617
    %v619 = vpop.f32.mrf.mxu0
    %620 = vmatprep.mubr.f32.mxu0 0.0
    %621 = vmatmul.mubr.f32.gmra.mxu0 %v520
    %v622 = vpop.f32.mrf.mxu0
    %v623 = vadd.f32 0.0, %v622
    %v624 = vpop.f32.mrf.mxu0
    %625 = vmatprep.mubr.f32.mxu0 0.0
    %626 = vmatmul.mubr.f32.gmra.mxu0 %v521
    %v627 = vpop.f32.mrf.mxu0
    %v628 = vadd.f32 0.0, %v627
    %v629 = vpop.f32.mrf.mxu0
    %630 = vmatprep.mubr.f32.mxu0 0.0
    %631 = vmatmul.mubr.f32.gmra.mxu0 %v522
    %v632 = vpop.f32.mrf.mxu0
    %v633 = vadd.f32 0.0, %v632
    %v634 = vpop.f32.mrf.mxu0
    %635 = vmatprep.mubr.f32.mxu0 0.0
    %636 = vmatmul.mubr.f32.gmra.mxu0 %v523
    %v637 = vpop.f32.mrf.mxu0
    %v638 = vadd.f32 0.0, %v637
    %v639 = vpop.f32.mrf.mxu0
    %640 = vmatprep.mubr.f32.mxu0 0.0
    %641 = vmatmul.mubr.f32.gmra.mxu0 %v524
    %v642 = vpop.f32.mrf.mxu0
    %v643 = vadd.f32 0.0, %v642
    %v644 = vpop.f32.mrf.mxu0
    %645 = vmatprep.mubr.f32.mxu0 0.0
    %646 = vmatmul.mubr.f32.gmra.mxu0 %v525
    %v647 = vpop.f32.mrf.mxu0
    %v648 = vadd.f32 0.0, %v647
    %v649 = vpop.f32.mrf.mxu0
    %650 = vmatprep.mubr.f32.mxu0 0.0
    %651 = vmatmul.mubr.f32.gmra.mxu0 %v526
    %v652 = vpop.f32.mrf.mxu0
    %v653 = vadd.f32 0.0, %v652
    %v654 = vpop.f32.mrf.mxu0
    %655 = vmatprep.mubr.f32.mxu0 0.0
    %656 = vmatmul.mubr.f32.gmra.mxu0 %v527
    %v657 = vpop.f32.mrf.mxu0
    %v658 = vadd.f32 0.0, %v657
    %v659 = vpop.f32.mrf.mxu0
    %660 = vmatprep.mubr.f32.mxu0 0.0
    %661 = vmatmul.mubr.f32.gmra.mxu0 %v528
    %v662 = vpop.f32.mrf.mxu0
    %v663 = vadd.f32 0.0, %v662
    %v664 = vpop.f32.mrf.mxu0
    %665 = vmatprep.mubr.f32.mxu0 0.0
    %666 = vmatmul.mubr.f32.gmra.mxu0 %v529
    %v667 = vpop.f32.mrf.mxu0
    %v668 = vadd.f32 0.0, %v667
    %v669 = vpop.f32.mrf.mxu0
    %670 = vmatprep.mubr.f32.mxu0 0.0
    %671 = vmatmul.mubr.f32.gmra.mxu0 %v530
    %v672 = vpop.f32.mrf.mxu0
    %v673 = vadd.f32 0.0, %v672
    %v674 = vpop.f32.mrf.mxu0
    %675 = vmatprep.mubr.f32.mxu0 0.0
    %676 = vmatmul.mubr.f32.gmra.mxu0 %v531
    %v677 = vpop.f32.mrf.mxu0
    %v678 = vadd.f32 0.0, %v677
    %v679 = vpop.f32.mrf.mxu0
    %680 = vmatprep.mubr.f32.mxu0 0.0
    %681 = vmatmul.mubr.f32.gmra.mxu0 %v532
    %v682 = vpop.f32.mrf.mxu0
    %v683 = vadd.f32 0.0, %v682
    %v684 = vpop.f32.mrf.mxu0
    %685 = vmatprep.mubr.f32.mxu0 0.0
    %686 = vmatmul.mubr.f32.gmra.mxu0 %v533
    %v687 = vpop.f32.mrf.mxu0
    %v688 = vadd.f32 0.0, %v687
    %v689 = vpop.f32.mrf.mxu0
    %690 = vmatprep.mubr.f32.mxu0 0.0
    %691 = vmatmul.mubr.f32.gmra.mxu0 %v534
    %v692 = vpop.f32.mrf.mxu0
    %v693 = vadd.f32 0.0, %v692
    %v694 = vpop.f32.mrf.mxu0
    %695 = vdwg.mxu0
    %v696 = vmax.f32 %v618, 0.0
    %v697 = vmax.f32 %v623, 0.0
    %v698 = vmax.f32 %v628, 0.0
    %v699 = vmax.f32 %v633, 0.0
    %v700 = vmax.f32 %v638, 0.0
    %v701 = vmax.f32 %v643, 0.0
    %v702 = vmax.f32 %v648, 0.0
    %v703 = vmax.f32 %v653, 0.0
    %v704 = vmax.f32 %v658, 0.0
    %v705 = vmax.f32 %v663, 0.0
    %v706 = vmax.f32 %v668, 0.0
    %v707 = vmax.f32 %v673, 0.0
    %v708 = vmax.f32 %v678, 0.0
    %v709 = vmax.f32 %v683, 0.0
    %v710 = vmax.f32 %v688, 0.0
    %v711 = vmax.f32 %v693, 0.0
    %712 = vmatprep.subr.mxu0 0.0
    %713 = vmatpush1.msra.mxu0 %v711
    %714 = vmatprep.subr.mxu0 0.0
    %715 = vmatpush1.msra.mxu0 %v710
    %716 = vmatprep.subr.mxu0 0.0
    %717 = vmatpush1.msra.mxu0 %v709
    %718 = vmatprep.subr.mxu0 0.0
    %719 = vmatpush1.msra.mxu0 %v708
    %720 = vmatprep.subr.mxu0 0.0
    %721 = vmatpush1.msra.mxu0 %v707
    %722 = vmatprep.subr.mxu0 0.0
    %723 = vmatpush1.msra.mxu0 %v706
    %724 = vmatprep.subr.mxu0 0.0
    %725 = vmatpush1.msra.mxu0 %v705
    %726 = vmatprep.subr.mxu0 0.0
    %727 = vmatpush1.msra.mxu0 %v704
    %728 = vmatprep.subr.mxu0 0.0
    %729 = vmatpush1.msra.mxu0 %v703
    %730 = vmatprep.subr.mxu0 0.0
    %731 = vmatpush1.msra.mxu0 %v702
    %732 = vmatprep.subr.mxu0 0.0
    %733 = vmatpush1.msra.mxu0 %v701
    %734 = vmatprep.subr.mxu0 0.0
    %735 = vmatpush1.msra.mxu0 %v700
    %736 = vmatprep.subr.mxu0 0.0
    %737 = vmatpush1.msra.mxu0 %v699
    %738 = vmatprep.subr.mxu0 0.0
    %739 = vmatpush1.msra.mxu0 %v698
    %740 = vmatprep.subr.mxu0 0.0
    %741 = vmatpush1.msra.mxu0 %v697
    %742 = vmatprep.subr.mxu0 0.0
    %743 = vmatpush1.msra.mxu0 %v696
    %744 = vmatprep.subr.mxu0 0.0
    %745 = vmatpush2.msra.mxu0 0.0
    %746 = vmatprep.subr.mxu0 0.0
    %747 = vmatpush2.msra.mxu0 0.0
    %748 = vmatprep.subr.mxu0 0.0
    %749 = vmatpush2.msra.mxu0 0.0
    %750 = vmatprep.subr.mxu0 0.0
    %751 = vmatpush2.msra.mxu0 0.0
    %752 = vmatprep.subr.mxu0 0.0
    %753 = vmatpush2.msra.mxu0 0.0
    %754 = vmatprep.subr.mxu0 0.0
    %755 = vmatpush2.msra.mxu0 0.0
    %756 = vmatprep.subr.mxu0 0.0
    %757 = vmatpush2.msra.mxu0 0.0
    %758 = vmatprep.subr.mxu0 0.0
    %759 = vmatpush2.msra.mxu0 0.0
    %760 = vmatprep.subr.mxu0 0.0
    %761 = vmatpush2.msra.mxu0 0.0
    %762 = vmatprep.subr.mxu0 0.0
    %763 = vmatpush2.msra.mxu0 0.0
    %764 = vmatprep.subr.mxu0 0.0
    %765 = vmatpush2.msra.mxu0 0.0
    %766 = vmatprep.subr.mxu0 0.0
    %767 = vmatpush2.msra.mxu0 0.0
    %768 = vmatprep.subr.mxu0 0.0
    %769 = vmatpush2.msra.mxu0 0.0
    %770 = vmatprep.subr.mxu0 0.0
    %771 = vmatpush2.msra.mxu0 0.0
    %772 = vmatprep.subr.mxu0 0.0
    %773 = vmatpush2.msra.mxu0 0.0
    %774 = vmatprep.subr.mxu0 0.0
    %775 = vmatpush2.msra.mxu0 0.0
    %776 = vmatprep.mubr.f32.mxu0 0.0
    %777 = vmatmul.mubr.f32.gmra.mxu0 %v181
    %v778 = vpop.f32.mrf.mxu0
    %v779 = vadd.f32 0.0, %v778
    %v780 = vpop.f32.mrf.mxu0
    %781 = vmatprep.mubr.f32.mxu0 0.0
    %782 = vmatmul.mubr.f32.gmra.mxu0 %v182
    %v783 = vpop.f32.mrf.mxu0
    %v784 = vadd.f32 0.0, %v783
    %v785 = vpop.f32.mrf.mxu0
    %786 = vmatprep.mubr.f32.mxu0 0.0
    %787 = vmatmul.mubr.f32.gmra.mxu0 %v183
    %v788 = vpop.f32.mrf.mxu0
    %v789 = vadd.f32 0.0, %v788
    %v790 = vpop.f32.mrf.mxu0
    %791 = vmatprep.mubr.f32.mxu0 0.0
    %792 = vmatmul.mubr.f32.gmra.mxu0 %v184
    %v793 = vpop.f32.mrf.mxu0
    %v794 = vadd.f32 0.0, %v793
    %v795 = vpop.f32.mrf.mxu0
    %796 = vmatprep.mubr.f32.mxu0 0.0
    %797 = vmatmul.mubr.f32.gmra.mxu0 %v185
    %v798 = vpop.f32.mrf.mxu0
    %v799 = vadd.f32 0.0, %v798
    %v800 = vpop.f32.mrf.mxu0
    %801 = vmatprep.mubr.f32.mxu0 0.0
    %802 = vmatmul.mubr.f32.gmra.mxu0 %v186
    %v803 = vpop.f32.mrf.mxu0
    %v804 = vadd.f32 0.0, %v803
    %v805 = vpop.f32.mrf.mxu0
    %806 = vmatprep.mubr.f32.mxu0 0.0
    %807 = vmatmul.mubr.f32.gmra.mxu0 %v187
    %v808 = vpop.f32.mrf.mxu0
    %v809 = vadd.f32 0.0, %v808
    %v810 = vpop.f32.mrf.mxu0
    %811 = vmatprep.mubr.f32.mxu0 0.0
    %812 = vmatmul.mubr.f32.gmra.mxu0 %v188
    %v813 = vpop.f32.mrf.mxu0
    %v814 = vadd.f32 0.0, %v813
    %v815 = vpop.f32.mrf.mxu0
    %816 = vmatprep.mubr.f32.mxu0 0.0
    %817 = vmatmul.mubr.f32.gmra.mxu0 %v189
    %v818 = vpop.f32.mrf.mxu0
    %v819 = vadd.f32 0.0, %v818
    %v820 = vpop.f32.mrf.mxu0
    %821 = vmatprep.mubr.f32.mxu0 0.0
    %822 = vmatmul.mubr.f32.gmra.mxu0 %v190
    %v823 = vpop.f32.mrf.mxu0
    %v824 = vadd.f32 0.0, %v823
    %v825 = vpop.f32.mrf.mxu0
    %826 = vmatprep.mubr.f32.mxu0 0.0
    %827 = vmatmul.mubr.f32.gmra.mxu0 %v191
    %v828 = vpop.f32.mrf.mxu0
    %v829 = vadd.f32 0.0, %v828
    %v830 = vpop.f32.mrf.mxu0
    %831 = vmatprep.mubr.f32.mxu0 0.0
    %832 = vmatmul.mubr.f32.gmra.mxu0 %v192
    %v833 = vpop.f32.mrf.mxu0
    %v834 = vadd.f32 0.0, %v833
    %v835 = vpop.f32.mrf.mxu0
    %836 = vmatprep.mubr.f32.mxu0 0.0
    %837 = vmatmul.mubr.f32.gmra.mxu0 %v193
    %v838 = vpop.f32.mrf.mxu0
    %v839 = vadd.f32 0.0, %v838
    %v840 = vpop.f32.mrf.mxu0
    %841 = vmatprep.mubr.f32.mxu0 0.0
    %842 = vmatmul.mubr.f32.gmra.mxu0 %v194
    %v843 = vpop.f32.mrf.mxu0
    %v844 = vadd.f32 0.0, %v843
    %v845 = vpop.f32.mrf.mxu0
    %846 = vmatprep.mubr.f32.mxu0 0.0
    %847 = vmatmul.mubr.f32.gmra.mxu0 %v195
    %v848 = vpop.f32.mrf.mxu0
    %v849 = vadd.f32 0.0, %v848
    %v850 = vpop.f32.mrf.mxu0
    %851 = vmatprep.mubr.f32.mxu0 0.0
    %852 = vmatmul.mubr.f32.gmra.mxu0 %v196
    %v853 = vpop.f32.mrf.mxu0
    %v854 = vadd.f32 0.0, %v853
    %v855 = vpop.f32.mrf.mxu0
    %856 = vdwg.mxu0
    %v857 = vld [vmem:[#allocation10] sm:$0xff]
    %v858 = vld [vmem:[#allocation10 + $0x8] sm:$0xff]
    %v859 = vld [vmem:[#allocation10 + $0x10] sm:$0xff]
    %v860 = vld [vmem:[#allocation10 + $0x18] sm:$0xff]
    %v861 = vld [vmem:[#allocation10 + $0x20] sm:$0xff]
    %v862 = vld [vmem:[#allocation10 + $0x28] sm:$0xff]
    %v863 = vld [vmem:[#allocation10 + $0x30] sm:$0xff]
    %v864 = vld [vmem:[#allocation10 + $0x38] sm:$0xff]
    %v865 = vld [vmem:[#allocation10 + $0x40] sm:$0xff]
    %v866 = vld [vmem:[#allocation10 + $0x48] sm:$0xff]
    %v867 = vld [vmem:[#allocation10 + $0x50] sm:$0xff]
    %v868 = vld [vmem:[#allocation10 + $0x58] sm:$0xff]
    %v869 = vld [vmem:[#allocation10 + $0x60] sm:$0xff]
    %v870 = vld [vmem:[#allocation10 + $0x68] sm:$0xff]
    %v871 = vld [vmem:[#allocation10 + $0x70] sm:$0xff]
    %v872 = vld [vmem:[#allocation10 + $0x78] sm:$0xff]
    %873 = vmatprep.subr.mxu0 0.0
    %874 = vmatpush1.msra.mxu0 %v872
    %875 = vmatprep.subr.mxu0 0.0
    %876 = vmatpush1.msra.mxu0 %v871
    %877 = vmatprep.subr.mxu0 0.0
    %878 = vmatpush1.msra.mxu0 %v870
    %879 = vmatprep.subr.mxu0 0.0
    %880 = vmatpush1.msra.mxu0 %v869
    %881 = vmatprep.subr.mxu0 0.0
    %882 = vmatpush1.msra.mxu0 %v868
    %883 = vmatprep.subr.mxu0 0.0
    %884 = vmatpush1.msra.mxu0 %v867
    %885 = vmatprep.subr.mxu0 0.0
    %886 = vmatpush1.msra.mxu0 %v866
    %887 = vmatprep.subr.mxu0 0.0
    %888 = vmatpush1.msra.mxu0 %v865
    %889 = vmatprep.subr.mxu0 0.0
    %890 = vmatpush1.msra.mxu0 %v864
    %891 = vmatprep.subr.mxu0 0.0
    %892 = vmatpush1.msra.mxu0 %v863
    %893 = vmatprep.subr.mxu0 0.0
    %894 = vmatpush1.msra.mxu0 %v862
    %895 = vmatprep.subr.mxu0 0.0
    %896 = vmatpush1.msra.mxu0 %v861
    %897 = vmatprep.subr.mxu0 0.0
    %898 = vmatpush1.msra.mxu0 %v860
    %899 = vmatprep.subr.mxu0 0.0
    %900 = vmatpush1.msra.mxu0 %v859
    %901 = vmatprep.subr.mxu0 0.0
    %902 = vmatpush1.msra.mxu0 %v858
    %903 = vmatprep.subr.mxu0 0.0
    %904 = vmatpush1.msra.mxu0 %v857
    %905 = vmatprep.subr.mxu0 0.0
    %906 = vmatpush2.msra.mxu0 0.0
    %907 = vmatprep.subr.mxu0 0.0
    %908 = vmatpush2.msra.mxu0 0.0
    %909 = vmatprep.subr.mxu0 0.0
    %910 = vmatpush2.msra.mxu0 0.0
    %911 = vmatprep.subr.mxu0 0.0
    %912 = vmatpush2.msra.mxu0 0.0
    %913 = vmatprep.subr.mxu0 0.0
    %914 = vmatpush2.msra.mxu0 0.0
    %915 = vmatprep.subr.mxu0 0.0
    %916 = vmatpush2.msra.mxu0 0.0
    %917 = vmatprep.subr.mxu0 0.0
    %918 = vmatpush2.msra.mxu0 0.0
    %919 = vmatprep.subr.mxu0 0.0
    %920 = vmatpush2.msra.mxu0 0.0
    %921 = vmatprep.subr.mxu0 0.0
    %922 = vmatpush2.msra.mxu0 0.0
    %923 = vmatprep.subr.mxu0 0.0
    %924 = vmatpush2.msra.mxu0 0.0
    %925 = vmatprep.subr.mxu0 0.0
    %926 = vmatpush2.msra.mxu0 0.0
    %927 = vmatprep.subr.mxu0 0.0
    %928 = vmatpush2.msra.mxu0 0.0
    %929 = vmatprep.subr.mxu0 0.0
    %930 = vmatpush2.msra.mxu0 0.0
    %931 = vmatprep.subr.mxu0 0.0
    %932 = vmatpush2.msra.mxu0 0.0
    %933 = vmatprep.subr.mxu0 0.0
    %934 = vmatpush2.msra.mxu0 0.0
    %935 = vmatprep.subr.mxu0 0.0
    %936 = vmatpush2.msra.mxu0 0.0
    %937 = vmatprep.mubr.f32.mxu0 0.0
    %938 = vmatmul.mubr.f32.gmra.mxu0 %v779
    %v939 = vpop.f32.mrf.mxu0
    %v940 = vadd.f32 0.0, %v939
    %v941 = vpop.f32.mrf.mxu0
    %942 = vmatprep.mubr.f32.mxu0 0.0
    %943 = vmatmul.mubr.f32.gmra.mxu0 %v784
    %v944 = vpop.f32.mrf.mxu0
    %v945 = vadd.f32 0.0, %v944
    %v946 = vpop.f32.mrf.mxu0
    %947 = vmatprep.mubr.f32.mxu0 0.0
    %948 = vmatmul.mubr.f32.gmra.mxu0 %v789
    %v949 = vpop.f32.mrf.mxu0
    %v950 = vadd.f32 0.0, %v949
    %v951 = vpop.f32.mrf.mxu0
    %952 = vmatprep.mubr.f32.mxu0 0.0
    %953 = vmatmul.mubr.f32.gmra.mxu0 %v794
    %v954 = vpop.f32.mrf.mxu0
    %v955 = vadd.f32 0.0, %v954
    %v956 = vpop.f32.mrf.mxu0
    %957 = vmatprep.mubr.f32.mxu0 0.0
    %958 = vmatmul.mubr.f32.gmra.mxu0 %v799
    %v959 = vpop.f32.mrf.mxu0
    %v960 = vadd.f32 0.0, %v959
    %v961 = vpop.f32.mrf.mxu0
    %962 = vmatprep.mubr.f32.mxu0 0.0
    %963 = vmatmul.mubr.f32.gmra.mxu0 %v804
    %v964 = vpop.f32.mrf.mxu0
    %v965 = vadd.f32 0.0, %v964
    %v966 = vpop.f32.mrf.mxu0
    %967 = vmatprep.mubr.f32.mxu0 0.0
    %968 = vmatmul.mubr.f32.gmra.mxu0 %v809
    %v969 = vpop.f32.mrf.mxu0
    %v970 = vadd.f32 0.0, %v969
    %v971 = vpop.f32.mrf.mxu0
    %972 = vmatprep.mubr.f32.mxu0 0.0
    %973 = vmatmul.mubr.f32.gmra.mxu0 %v814
    %v974 = vpop.f32.mrf.mxu0
    %v975 = vadd.f32 0.0, %v974
    %v976 = vpop.f32.mrf.mxu0
    %977 = vmatprep.mubr.f32.mxu0 0.0
    %978 = vmatmul.mubr.f32.gmra.mxu0 %v819
    %v979 = vpop.f32.mrf.mxu0
    %v980 = vadd.f32 0.0, %v979
    %v981 = vpop.f32.mrf.mxu0
    %982 = vmatprep.mubr.f32.mxu0 0.0
    %983 = vmatmul.mubr.f32.gmra.mxu0 %v824
    %v984 = vpop.f32.mrf.mxu0
    %v985 = vadd.f32 0.0, %v984
    %v986 = vpop.f32.mrf.mxu0
    %987 = vmatprep.mubr.f32.mxu0 0.0
    %988 = vmatmul.mubr.f32.gmra.mxu0 %v829
    %v989 = vpop.f32.mrf.mxu0
    %v990 = vadd.f32 0.0, %v989
    %v991 = vpop.f32.mrf.mxu0
    %992 = vmatprep.mubr.f32.mxu0 0.0
    %993 = vmatmul.mubr.f32.gmra.mxu0 %v834
    %v994 = vpop.f32.mrf.mxu0
    %v995 = vadd.f32 0.0, %v994
    %v996 = vpop.f32.mrf.mxu0
    %997 = vmatprep.mubr.f32.mxu0 0.0
    %998 = vmatmul.mubr.f32.gmra.mxu0 %v839
    %v999 = vpop.f32.mrf.mxu0
    %v1000 = vadd.f32 0.0, %v999
    %v1001 = vpop.f32.mrf.mxu0
    %1002 = vmatprep.mubr.f32.mxu0 0.0
    %1003 = vmatmul.mubr.f32.gmra.mxu0 %v844
    %v1004 = vpop.f32.mrf.mxu0
    %v1005 = vadd.f32 0.0, %v1004
    %v1006 = vpop.f32.mrf.mxu0
    %1007 = vmatprep.mubr.f32.mxu0 0.0
    %1008 = vmatmul.mubr.f32.gmra.mxu0 %v849
    %v1009 = vpop.f32.mrf.mxu0
    %v1010 = vadd.f32 0.0, %v1009
    %v1011 = vpop.f32.mrf.mxu0
    %1012 = vmatprep.mubr.f32.mxu0 0.0
    %1013 = vmatmul.mubr.f32.gmra.mxu0 %v854
    %v1014 = vpop.f32.mrf.mxu0
    %v1015 = vadd.f32 0.0, %v1014
    %v1016 = vpop.f32.mrf.mxu0
    %1017 = vdwg.mxu0
    %v1018 = vmax.f32 %v940, 0.0
    %v1019 = vmax.f32 %v945, 0.0
    %v1020 = vmax.f32 %v950, 0.0
    %v1021 = vmax.f32 %v955, 0.0
    %v1022 = vmax.f32 %v960, 0.0
    %v1023 = vmax.f32 %v965, 0.0
    %v1024 = vmax.f32 %v970, 0.0
    %v1025 = vmax.f32 %v975, 0.0
    %v1026 = vmax.f32 %v980, 0.0
    %v1027 = vmax.f32 %v985, 0.0
    %v1028 = vmax.f32 %v990, 0.0
    %v1029 = vmax.f32 %v995, 0.0
    %v1030 = vmax.f32 %v1000, 0.0
    %v1031 = vmax.f32 %v1005, 0.0
    %v1032 = vmax.f32 %v1010, 0.0
    %v1033 = vmax.f32 %v1015, 0.0
    %v1034 = vld [vmem:[#allocation11] sm:$0xff]
    %v1035 = vld [vmem:[#allocation11 + $0x8] sm:$0xff]
    %v1036 = vld [vmem:[#allocation11 + $0x10] sm:$0xff]
    %v1037 = vld [vmem:[#allocation11 + $0x18] sm:$0xff]
    %v1038 = vld [vmem:[#allocation11 + $0x20] sm:$0xff]
    %v1039 = vld [vmem:[#allocation11 + $0x28] sm:$0xff]
    %v1040 = vld [vmem:[#allocation11 + $0x30] sm:$0xff]
    %v1041 = vld [vmem:[#allocation11 + $0x38] sm:$0xff]
    %v1042 = vld [vmem:[#allocation11 + $0x40] sm:$0xff]
    %v1043 = vld [vmem:[#allocation11 + $0x48] sm:$0xff]
    %v1044 = vld [vmem:[#allocation11 + $0x50] sm:$0xff]
    %v1045 = vld [vmem:[#allocation11 + $0x58] sm:$0xff]
    %v1046 = vld [vmem:[#allocation11 + $0x60] sm:$0xff]
    %v1047 = vld [vmem:[#allocation11 + $0x68] sm:$0xff]
    %v1048 = vld [vmem:[#allocation11 + $0x70] sm:$0xff]
    %v1049 = vld [vmem:[#allocation11 + $0x78] sm:$0xff]
    %1050 = vmatprep.subr.mxu0 0.0
    %1051 = vmatpush1.msra.mxu0 %v1049
    %1052 = vmatprep.subr.mxu0 0.0
    %1053 = vmatpush1.msra.mxu0 %v1048
    %1054 = vmatprep.subr.mxu0 0.0
    %1055 = vmatpush1.msra.mxu0 %v1047
    %1056 = vmatprep.subr.mxu0 0.0
    %1057 = vmatpush1.msra.mxu0 %v1046
    %1058 = vmatprep.subr.mxu0 0.0
    %1059 = vmatpush1.msra.mxu0 %v1045
    %1060 = vmatprep.subr.mxu0 0.0
    %1061 = vmatpush1.msra.mxu0 %v1044
    %1062 = vmatprep.subr.mxu0 0.0
    %1063 = vmatpush1.msra.mxu0 %v1043
    %1064 = vmatprep.subr.mxu0 0.0
    %1065 = vmatpush1.msra.mxu0 %v1042
    %1066 = vmatprep.subr.mxu0 0.0
    %1067 = vmatpush1.msra.mxu0 %v1041
    %1068 = vmatprep.subr.mxu0 0.0
    %1069 = vmatpush1.msra.mxu0 %v1040
    %1070 = vmatprep.subr.mxu0 0.0
    %1071 = vmatpush1.msra.mxu0 %v1039
    %1072 = vmatprep.subr.mxu0 0.0
    %1073 = vmatpush1.msra.mxu0 %v1038
    %1074 = vmatprep.subr.mxu0 0.0
    %1075 = vmatpush1.msra.mxu0 %v1037
    %1076 = vmatprep.subr.mxu0 0.0
    %1077 = vmatpush1.msra.mxu0 %v1036
    %1078 = vmatprep.subr.mxu0 0.0
    %1079 = vmatpush1.msra.mxu0 %v1035
    %1080 = vmatprep.subr.mxu0 0.0
    %1081 = vmatpush1.msra.mxu0 %v1034
    %1082 = vmatprep.subr.mxu0 0.0
    %1083 = vmatpush2.msra.mxu0 0.0
    %1084 = vmatprep.subr.mxu0 0.0
    %1085 = vmatpush2.msra.mxu0 0.0
    %1086 = vmatprep.subr.mxu0 0.0
    %1087 = vmatpush2.msra.mxu0 0.0
    %1088 = vmatprep.subr.mxu0 0.0
    %1089 = vmatpush2.msra.mxu0 0.0
    %1090 = vmatprep.subr.mxu0 0.0
    %1091 = vmatpush2.msra.mxu0 0.0
    %1092 = vmatprep.subr.mxu0 0.0
    %1093 = vmatpush2.msra.mxu0 0.0
    %1094 = vmatprep.subr.mxu0 0.0
    %1095 = vmatpush2.msra.mxu0 0.0
    %1096 = vmatprep.subr.mxu0 0.0
    %1097 = vmatpush2.msra.mxu0 0.0
    %1098 = vmatprep.subr.mxu0 0.0
    %1099 = vmatpush2.msra.mxu0 0.0
    %1100 = vmatprep.subr.mxu0 0.0
    %1101 = vmatpush2.msra.mxu0 0.0
    %1102 = vmatprep.subr.mxu0 0.0
    %1103 = vmatpush2.msra.mxu0 0.0
    %1104 = vmatprep.subr.mxu0 0.0
    %1105 = vmatpush2.msra.mxu0 0.0
    %1106 = vmatprep.subr.mxu0 0.0
    %1107 = vmatpush2.msra.mxu0 0.0
    %1108 = vmatprep.subr.mxu0 0.0
    %1109 = vmatpush2.msra.mxu0 0.0
    %1110 = vmatprep.subr.mxu0 0.0
    %1111 = vmatpush2.msra.mxu0 0.0
    %1112 = vmatprep.subr.mxu0 0.0
    %1113 = vmatpush2.msra.mxu0 0.0
    %1114 = vmatprep.mubr.f32.mxu0 0.0
    %1115 = vmatmul.mubr.f32.gmra.mxu0 %v1018
    %v1116 = vpop.f32.mrf.mxu0
    %v1117 = vadd.f32 0.0, %v1116
    %v1118 = vpop.f32.mrf.mxu0
    %1119 = vmatprep.mubr.f32.mxu0 0.0
    %1120 = vmatmul.mubr.f32.gmra.mxu0 %v1019
    %v1121 = vpop.f32.mrf.mxu0
    %v1122 = vadd.f32 0.0, %v1121
    %v1123 = vpop.f32.mrf.mxu0
    %1124 = vmatprep.mubr.f32.mxu0 0.0
    %1125 = vmatmul.mubr.f32.gmra.mxu0 %v1020
    %v1126 = vpop.f32.mrf.mxu0
    %v1127 = vadd.f32 0.0, %v1126
    %v1128 = vpop.f32.mrf.mxu0
    %1129 = vmatprep.mubr.f32.mxu0 0.0
    %1130 = vmatmul.mubr.f32.gmra.mxu0 %v1021
    %v1131 = vpop.f32.mrf.mxu0
    %v1132 = vadd.f32 0.0, %v1131
    %v1133 = vpop.f32.mrf.mxu0
    %1134 = vmatprep.mubr.f32.mxu0 0.0
    %1135 = vmatmul.mubr.f32.gmra.mxu0 %v1022
    %v1136 = vpop.f32.mrf.mxu0
    %v1137 = vadd.f32 0.0, %v1136
    %v1138 = vpop.f32.mrf.mxu0
    %1139 = vmatprep.mubr.f32.mxu0 0.0
    %1140 = vmatmul.mubr.f32.gmra.mxu0 %v1023
    %v1141 = vpop.f32.mrf.mxu0
    %v1142 = vadd.f32 0.0, %v1141
    %v1143 = vpop.f32.mrf.mxu0
    %1144 = vmatprep.mubr.f32.mxu0 0.0
    %1145 = vmatmul.mubr.f32.gmra.mxu0 %v1024
    %v1146 = vpop.f32.mrf.mxu0
    %v1147 = vadd.f32 0.0, %v1146
    %v1148 = vpop.f32.mrf.mxu0
    %1149 = vmatprep.mubr.f32.mxu0 0.0
    %1150 = vmatmul.mubr.f32.gmra.mxu0 %v1025
    %v1151 = vpop.f32.mrf.mxu0
    %v1152 = vadd.f32 0.0, %v1151
    %v1153 = vpop.f32.mrf.mxu0
    %1154 = vmatprep.mubr.f32.mxu0 0.0
    %1155 = vmatmul.mubr.f32.gmra.mxu0 %v1026
    %v1156 = vpop.f32.mrf.mxu0
    %v1157 = vadd.f32 0.0, %v1156
    %v1158 = vpop.f32.mrf.mxu0
    %1159 = vmatprep.mubr.f32.mxu0 0.0
    %1160 = vmatmul.mubr.f32.gmra.mxu0 %v1027
    %v1161 = vpop.f32.mrf.mxu0
    %v1162 = vadd.f32 0.0, %v1161
    %v1163 = vpop.f32.mrf.mxu0
    %1164 = vmatprep.mubr.f32.mxu0 0.0
    %1165 = vmatmul.mubr.f32.gmra.mxu0 %v1028
    %v1166 = vpop.f32.mrf.mxu0
    %v1167 = vadd.f32 0.0, %v1166
    %v1168 = vpop.f32.mrf.mxu0
    %1169 = vmatprep.mubr.f32.mxu0 0.0
    %1170 = vmatmul.mubr.f32.gmra.mxu0 %v1029
    %v1171 = vpop.f32.mrf.mxu0
    %v1172 = vadd.f32 0.0, %v1171
    %v1173 = vpop.f32.mrf.mxu0
    %1174 = vmatprep.mubr.f32.mxu0 0.0
    %1175 = vmatmul.mubr.f32.gmra.mxu0 %v1030
    %v1176 = vpop.f32.mrf.mxu0
    %v1177 = vadd.f32 0.0, %v1176
    %v1178 = vpop.f32.mrf.mxu0
    %1179 = vmatprep.mubr.f32.mxu0 0.0
    %1180 = vmatmul.mubr.f32.gmra.mxu0 %v1031
    %v1181 = vpop.f32.mrf.mxu0
    %v1182 = vadd.f32 0.0, %v1181
    %v1183 = vpop.f32.mrf.mxu0
    %1184 = vmatprep.mubr.f32.mxu0 0.0
    %1185 = vmatmul.mubr.f32.gmra.mxu0 %v1032
    %v1186 = vpop.f32.mrf.mxu0
    %v1187 = vadd.f32 0.0, %v1186
    %v1188 = vpop.f32.mrf.mxu0
    %1189 = vmatprep.mubr.f32.mxu0 0.0
    %1190 = vmatmul.mubr.f32.gmra.mxu0 %v1033
    %v1191 = vpop.f32.mrf.mxu0
    %v1192 = vadd.f32 0.0, %v1191
    %v1193 = vpop.f32.mrf.mxu0
    %1194 = vdwg.mxu0
    %v1195 = vmax.f32 %v1117, 0.0
    %v1196 = vmax.f32 %v1122, 0.0
    %v1197 = vmax.f32 %v1127, 0.0
    %v1198 = vmax.f32 %v1132, 0.0
    %v1199 = vmax.f32 %v1137, 0.0
    %v1200 = vmax.f32 %v1142, 0.0
    %v1201 = vmax.f32 %v1147, 0.0
    %v1202 = vmax.f32 %v1152, 0.0
    %v1203 = vmax.f32 %v1157, 0.0
    %v1204 = vmax.f32 %v1162, 0.0
    %v1205 = vmax.f32 %v1167, 0.0
    %v1206 = vmax.f32 %v1172, 0.0
    %v1207 = vmax.f32 %v1177, 0.0
    %v1208 = vmax.f32 %v1182, 0.0
    %v1209 = vmax.f32 %v1187, 0.0
    %v1210 = vmax.f32 %v1192, 0.0
    %v1211 = vld [vmem:[%s6] sm:$0xff]
    %1212 = vmatprep.subr.mxu0 0.0
    %1213 = vmatpush1.msra.mxu0 %v1210
    %1214 = vmatprep.subr.mxu0 0.0
    %1215 = vmatpush1.msra.mxu0 %v1209
    %1216 = vmatprep.subr.mxu0 0.0
    %1217 = vmatpush1.msra.mxu0 %v1208
    %1218 = vmatprep.subr.mxu0 0.0
    %1219 = vmatpush1.msra.mxu0 %v1207
    %1220 = vmatprep.subr.mxu0 0.0
    %1221 = vmatpush1.msra.mxu0 %v1206
    %1222 = vmatprep.subr.mxu0 0.0
    %1223 = vmatpush1.msra.mxu0 %v1205
    %1224 = vmatprep.subr.mxu0 0.0
    %1225 = vmatpush1.msra.mxu0 %v1204
    %1226 = vmatprep.subr.mxu0 0.0
    %1227 = vmatpush1.msra.mxu0 %v1203
    %1228 = vmatprep.subr.mxu0 0.0
    %1229 = vmatpush1.msra.mxu0 %v1202
    %1230 = vmatprep.subr.mxu0 0.0
    %1231 = vmatpush1.msra.mxu0 %v1201
    %1232 = vmatprep.subr.mxu0 0.0
    %1233 = vmatpush1.msra.mxu0 %v1200
    %1234 = vmatprep.subr.mxu0 0.0
    %1235 = vmatpush1.msra.mxu0 %v1199
    %1236 = vmatprep.subr.mxu0 0.0
    %1237 = vmatpush1.msra.mxu0 %v1198
    %1238 = vmatprep.subr.mxu0 0.0
    %1239 = vmatpush1.msra.mxu0 %v1197
    %1240 = vmatprep.subr.mxu0 0.0
    %1241 = vmatpush1.msra.mxu0 %v1196
    %1242 = vmatprep.subr.mxu0 0.0
    %1243 = vmatpush1.msra.mxu0 %v1195
    %1244 = vmatprep.subr.mxu0 0.0
    %1245 = vmatpush2.msra.mxu0 0.0
    %1246 = vmatprep.subr.mxu0 0.0
    %1247 = vmatpush2.msra.mxu0 0.0
    %1248 = vmatprep.subr.mxu0 0.0
    %1249 = vmatpush2.msra.mxu0 0.0
    %1250 = vmatprep.subr.mxu0 0.0
    %1251 = vmatpush2.msra.mxu0 0.0
    %1252 = vmatprep.subr.mxu0 0.0
    %1253 = vmatpush2.msra.mxu0 0.0
    %1254 = vmatprep.subr.mxu0 0.0
    %1255 = vmatpush2.msra.mxu0 0.0
    %1256 = vmatprep.subr.mxu0 0.0
    %1257 = vmatpush2.msra.mxu0 0.0
    %1258 = vmatprep.subr.mxu0 0.0
    %1259 = vmatpush2.msra.mxu0 0.0
    %1260 = vmatprep.subr.mxu0 0.0
    %1261 = vmatpush2.msra.mxu0 0.0
    %1262 = vmatprep.subr.mxu0 0.0
    %1263 = vmatpush2.msra.mxu0 0.0
    %1264 = vmatprep.subr.mxu0 0.0
    %1265 = vmatpush2.msra.mxu0 0.0
    %1266 = vmatprep.subr.mxu0 0.0
    %1267 = vmatpush2.msra.mxu0 0.0
    %1268 = vmatprep.subr.mxu0 0.0
    %1269 = vmatpush2.msra.mxu0 0.0
    %1270 = vmatprep.subr.mxu0 0.0
    %1271 = vmatpush2.msra.mxu0 0.0
    %1272 = vmatprep.subr.mxu0 0.0
    %1273 = vmatpush2.msra.mxu0 0.0
    %1274 = vmatprep.subr.mxu0 0.0
    %1275 = vmatpush2.msra.mxu0 0.0
    %1276 = vmatprep.mubr.f32.mxu0 0.0
    %1277 = vmatmul.mubr.f32.gmra.mxu0 %v1211
    %v1278 = vpop.f32.mrf.mxu0
    %v1279 = vadd.f32 0.0, %v1278
    %v1280 = vpop.f32.mrf.mxu0
    %1281 = vdwg.mxu0
    %v1282 = vld [vmem:[%s7] sm:$0xff]
    %1284 = vset.pattern.permute.xlu0 0
    %1285 = vperm.xlu0 %1284, %v1282
    %v1286 = vpop.permute.xlu0 %1285
    %v1288 = vmul.f32 %v1279, %v1286
    %v1289 = vld [vmem:[#allocation13] sm:$0xff]
    %v1290 = vld [vmem:[#allocation13 + $0x8] sm:$0xff]
    %v1291 = vld [vmem:[#allocation13 + $0x10] sm:$0xff]
    %v1292 = vld [vmem:[#allocation13 + $0x18] sm:$0xff]
    %v1293 = vld [vmem:[#allocation13 + $0x20] sm:$0xff]
    %v1294 = vld [vmem:[#allocation13 + $0x28] sm:$0xff]
    %v1295 = vld [vmem:[#allocation13 + $0x30] sm:$0xff]
    %v1296 = vld [vmem:[#allocation13 + $0x38] sm:$0xff]
    %v1297 = vld [vmem:[#allocation13 + $0x40] sm:$0xff]
    %v1298 = vld [vmem:[#allocation13 + $0x48] sm:$0xff]
    %v1299 = vld [vmem:[#allocation13 + $0x50] sm:$0xff]
    %v1300 = vld [vmem:[#allocation13 + $0x58] sm:$0xff]
    %v1301 = vld [vmem:[#allocation13 + $0x60] sm:$0xff]
    %v1302 = vld [vmem:[#allocation13 + $0x68] sm:$0xff]
    %v1303 = vld [vmem:[#allocation13 + $0x70] sm:$0xff]
    %v1304 = vld [vmem:[#allocation13 + $0x78] sm:$0xff]
    %vm1305 = vcmp.gt.f32.partialorder %v1289, 0.0
    %vm1306 = vcmp.gt.f32.partialorder %v1290, 0.0
    %vm1307 = vcmp.gt.f32.partialorder %v1291, 0.0
    %vm1308 = vcmp.gt.f32.partialorder %v1292, 0.0
    %vm1309 = vcmp.gt.f32.partialorder %v1293, 0.0
    %vm1310 = vcmp.gt.f32.partialorder %v1294, 0.0
    %vm1311 = vcmp.gt.f32.partialorder %v1295, 0.0
    %vm1312 = vcmp.gt.f32.partialorder %v1296, 0.0
    %vm1313 = vcmp.gt.f32.partialorder %v1297, 0.0
    %vm1314 = vcmp.gt.f32.partialorder %v1298, 0.0
    %vm1315 = vcmp.gt.f32.partialorder %v1299, 0.0
    %vm1316 = vcmp.gt.f32.partialorder %v1300, 0.0
    %vm1317 = vcmp.gt.f32.partialorder %v1301, 0.0
    %vm1318 = vcmp.gt.f32.partialorder %v1302, 0.0
    %vm1319 = vcmp.gt.f32.partialorder %v1303, 0.0
    %vm1320 = vcmp.gt.f32.partialorder %v1304, 0.0
    %v1321 = vsel %vm1305, 1, 0
    %v1322 = vsel %vm1306, 1, 0
    %v1323 = vsel %vm1307, 1, 0
    %v1324 = vsel %vm1308, 1, 0
    %v1325 = vsel %vm1309, 1, 0
    %v1326 = vsel %vm1310, 1, 0
    %v1327 = vsel %vm1311, 1, 0
    %v1328 = vsel %vm1312, 1, 0
    %v1329 = vsel %vm1313, 1, 0
    %v1330 = vsel %vm1314, 1, 0
    %v1331 = vsel %vm1315, 1, 0
    %v1332 = vsel %vm1316, 1, 0
    %v1333 = vsel %vm1317, 1, 0
    %v1334 = vsel %vm1318, 1, 0
    %v1335 = vsel %vm1319, 1, 0
    %v1336 = vsel %vm1320, 1, 0
    %1337 = vset.pattern.permute.xlu0 0
    %1338 = vperm.xlu0 %1337, %v1321
    %v1339 = vpop.permute.xlu0 %1338
    %1340 = vset.pattern.permute.xlu0 0
    %1341 = vperm.xlu0 %1340, %v1322
    %v1342 = vpop.permute.xlu0 %1341
    %1343 = vset.pattern.permute.xlu0 0
    %1344 = vperm.xlu0 %1343, %v1323
    %v1345 = vpop.permute.xlu0 %1344
    %1346 = vset.pattern.permute.xlu0 0
    %1347 = vperm.xlu0 %1346, %v1324
    %v1348 = vpop.permute.xlu0 %1347
    %1349 = vset.pattern.permute.xlu0 0
    %1350 = vperm.xlu0 %1349, %v1325
    %v1351 = vpop.permute.xlu0 %1350
    %1352 = vset.pattern.permute.xlu0 0
    %1353 = vperm.xlu0 %1352, %v1326
    %v1354 = vpop.permute.xlu0 %1353
    %1355 = vset.pattern.permute.xlu0 0
    %1356 = vperm.xlu0 %1355, %v1327
    %v1357 = vpop.permute.xlu0 %1356
    %1358 = vset.pattern.permute.xlu0 0
    %1359 = vperm.xlu0 %1358, %v1328
    %v1360 = vpop.permute.xlu0 %1359
    %1361 = vset.pattern.permute.xlu0 0
    %1362 = vperm.xlu0 %1361, %v1329
    %v1363 = vpop.permute.xlu0 %1362
    %1364 = vset.pattern.permute.xlu0 0
    %1365 = vperm.xlu0 %1364, %v1330
    %v1366 = vpop.permute.xlu0 %1365
    %1367 = vset.pattern.permute.xlu0 0
    %1368 = vperm.xlu0 %1367, %v1331
    %v1369 = vpop.permute.xlu0 %1368
    %1370 = vset.pattern.permute.xlu0 0
    %1371 = vperm.xlu0 %1370, %v1332
    %v1372 = vpop.permute.xlu0 %1371
    %1373 = vset.pattern.permute.xlu0 0
    %1374 = vperm.xlu0 %1373, %v1333
    %v1375 = vpop.permute.xlu0 %1374
    %1376 = vset.pattern.permute.xlu0 0
    %1377 = vperm.xlu0 %1376, %v1334
    %v1378 = vpop.permute.xlu0 %1377
    %1379 = vset.pattern.permute.xlu0 0
    %1380 = vperm.xlu0 %1379, %v1335
    %v1381 = vpop.permute.xlu0 %1380
    %1382 = vset.pattern.permute.xlu0 0
    %1383 = vperm.xlu0 %1382, %v1336
    %v1384 = vpop.permute.xlu0 %1383
    %vm1385 = vcmp.eq.s32.totalorder %v1339, 1
    %vm1386 = vcmp.eq.s32.totalorder %v1342, 1
    %vm1387 = vcmp.eq.s32.totalorder %v1345, 1
    %vm1388 = vcmp.eq.s32.totalorder %v1348, 1
    %vm1389 = vcmp.eq.s32.totalorder %v1351, 1
    %vm1390 = vcmp.eq.s32.totalorder %v1354, 1
    %vm1391 = vcmp.eq.s32.totalorder %v1357, 1
    %vm1392 = vcmp.eq.s32.totalorder %v1360, 1
    %vm1393 = vcmp.eq.s32.totalorder %v1363, 1
    %vm1394 = vcmp.eq.s32.totalorder %v1366, 1
    %vm1395 = vcmp.eq.s32.totalorder %v1369, 1
    %vm1396 = vcmp.eq.s32.totalorder %v1372, 1
    %vm1397 = vcmp.eq.s32.totalorder %v1375, 1
    %vm1398 = vcmp.eq.s32.totalorder %v1378, 1
    %vm1399 = vcmp.eq.s32.totalorder %v1381, 1
    %vm1400 = vcmp.eq.s32.totalorder %v1384, 1
    %v1401 = vsel %vm1385, %v1195, -1e+30
    %v1402 = vsel %vm1386, %v1196, -1e+30
    %v1403 = vsel %vm1387, %v1197, -1e+30
    %v1404 = vsel %vm1388, %v1198, -1e+30
    %v1405 = vsel %vm1389, %v1199, -1e+30
    %v1406 = vsel %vm1390, %v1200, -1e+30
    %v1407 = vsel %vm1391, %v1201, -1e+30
    %v1408 = vsel %vm1392, %v1202, -1e+30
    %v1409 = vsel %vm1393, %v1203, -1e+30
    %v1410 = vsel %vm1394, %v1204, -1e+30
    %v1411 = vsel %vm1395, %v1205, -1e+30
    %v1412 = vsel %vm1396, %v1206, -1e+30
    %v1413 = vsel %vm1397, %v1207, -1e+30
    %v1414 = vsel %vm1398, %v1208, -1e+30
    %v1415 = vsel %vm1399, %v1209, -1e+30
    %v1416 = vsel %vm1400, %v1210, -1e+30
    %v1417 = vmax.f32 %v1401, %v1405
    %v1418 = vmax.f32 %v1402, %v1406
    %v1419 = vmax.f32 %v1403, %v1407
    %v1420 = vmax.f32 %v1404, %v1408
    %v1421 = vmax.f32 %v1417, %v1409
    %v1422 = vmax.f32 %v1418, %v1410
    %v1423 = vmax.f32 %v1419, %v1411
    %v1424 = vmax.f32 %v1420, %v1412
    %v1425 = vmax.f32 %v1421, %v1413
    %v1426 = vmax.f32 %v1422, %v1414
    %v1427 = vmax.f32 %v1423, %v1415
    %v1428 = vmax.f32 %v1424, %v1416
    %v1429 = vmax.f32 %v1425, %v1426
    %v1430 = vmax.f32 %v1427, %v1428
    %v1431 = vmax.f32 %v1429, %v1430
    %v1432 = vrot.slane %v1431, 4
    %v1433 = vmax.f32 %v1431, %v1432
    %v1434 = vrot.slane %v1433, 2
    %v1435 = vmax.f32 %v1433, %v1434
    %v1436 = vrot.slane %v1435, 1
    %v1437 = vmax.f32 %v1435, %v1436
    %1438 = vset.pattern.permute.xlu0 1
    %1439 = vperm.xlu0 %1438, %v1321
    %v1440 = vpop.permute.xlu0 %1439
    %1441 = vset.pattern.permute.xlu0 1
    %1442 = vperm.xlu0 %1441, %v1322
    %v1443 = vpop.permute.xlu0 %1442
    %1444 = vset.pattern.permute.xlu0 1
    %1445 = vperm.xlu0 %1444, %v1323
    %v1446 = vpop.permute.xlu0 %1445
    %1447 = vset.pattern.permute.xlu0 1
    %1448 = vperm.xlu0 %1447, %v1324
    %v1449 = vpop.permute.xlu0 %1448
    %1450 = vset.pattern.permute.xlu0 1
    %1451 = vperm.xlu0 %1450, %v1325
    %v1452 = vpop.permute.xlu0 %1451
    %1453 = vset.pattern.permute.xlu0 1
    %1454 = vperm.xlu0 %1453, %v1326
    %v1455 = vpop.permute.xlu0 %1454
    %1456 = vset.pattern.permute.xlu0 1
    %1457 = vperm.xlu0 %1456, %v1327
    %v1458 = vpop.permute.xlu0 %1457
    %1459 = vset.pattern.permute.xlu0 1
    %1460 = vperm.xlu0 %1459, %v1328
    %v1461 = vpop.permute.xlu0 %1460
    %1462 = vset.pattern.permute.xlu0 1
    %1463 = vperm.xlu0 %1462, %v1329
    %v1464 = vpop.permute.xlu0 %1463
    %1465 = vset.pattern.permute.xlu0 1
    %1466 = vperm.xlu0 %1465, %v1330
    %v1467 = vpop.permute.xlu0 %1466
    %1468 = vset.pattern.permute.xlu0 1
    %1469 = vperm.xlu0 %1468, %v1331
    %v1470 = vpop.permute.xlu0 %1469
    %1471 = vset.pattern.permute.xlu0 1
    %1472 = vperm.xlu0 %1471, %v1332
    %v1473 = vpop.permute.xlu0 %1472
    %1474 = vset.pattern.permute.xlu0 1
    %1475 = vperm.xlu0 %1474, %v1333
    %v1476 = vpop.permute.xlu0 %1475
    %1477 = vset.pattern.permute.xlu0 1
    %1478 = vperm.xlu0 %1477, %v1334
    %v1479 = vpop.permute.xlu0 %1478
    %1480 = vset.pattern.permute.xlu0 1
    %1481 = vperm.xlu0 %1480, %v1335
    %v1482 = vpop.permute.xlu0 %1481
    %1483 = vset.pattern.permute.xlu0 1
    %1484 = vperm.xlu0 %1483, %v1336
    %v1485 = vpop.permute.xlu0 %1484
    %vm1486 = vcmp.eq.s32.totalorder %v1440, 1
    %vm1487 = vcmp.eq.s32.totalorder %v1443, 1
    %vm1488 = vcmp.eq.s32.totalorder %v1446, 1
    %vm1489 = vcmp.eq.s32.totalorder %v1449, 1
    %vm1490 = vcmp.eq.s32.totalorder %v1452, 1
    %vm1491 = vcmp.eq.s32.totalorder %v1455, 1
    %vm1492 = vcmp.eq.s32.totalorder %v1458, 1
    %vm1493 = vcmp.eq.s32.totalorder %v1461, 1
    %vm1494 = vcmp.eq.s32.totalorder %v1464, 1
    %vm1495 = vcmp.eq.s32.totalorder %v1467, 1
    %vm1496 = vcmp.eq.s32.totalorder %v1470, 1
    %vm1497 = vcmp.eq.s32.totalorder %v1473, 1
    %vm1498 = vcmp.eq.s32.totalorder %v1476, 1
    %vm1499 = vcmp.eq.s32.totalorder %v1479, 1
    %vm1500 = vcmp.eq.s32.totalorder %v1482, 1
    %vm1501 = vcmp.eq.s32.totalorder %v1485, 1
    %v1502 = vsel %vm1486, %v1195, -1e+30
    %v1503 = vsel %vm1487, %v1196, -1e+30
    %v1504 = vsel %vm1488, %v1197, -1e+30
    %v1505 = vsel %vm1489, %v1198, -1e+30
    %v1506 = vsel %vm1490, %v1199, -1e+30
    %v1507 = vsel %vm1491, %v1200, -1e+30
    %v1508 = vsel %vm1492, %v1201, -1e+30
    %v1509 = vsel %vm1493, %v1202, -1e+30
    %v1510 = vsel %vm1494, %v1203, -1e+30
    %v1511 = vsel %vm1495, %v1204, -1e+30
    %v1512 = vsel %vm1496, %v1205, -1e+30
    %v1513 = vsel %vm1497, %v1206, -1e+30
    %v1514 = vsel %vm1498, %v1207, -1e+30
    %v1515 = vsel %vm1499, %v1208, -1e+30
    %v1516 = vsel %vm1500, %v1209, -1e+30
    %v1517 = vsel %vm1501, %v1210, -1e+30
    %v1518 = vmax.f32 %v1502, %v1506
    %v1519 = vmax.f32 %v1503, %v1507
    %v1520 = vmax.f32 %v1504, %v1508
    %v1521 = vmax.f32 %v1505, %v1509
    %v1522 = vmax.f32 %v1518, %v1510
    %v1523 = vmax.f32 %v1519, %v1511
    %v1524 = vmax.f32 %v1520, %v1512
    %v1525 = vmax.f32 %v1521, %v1513
    %v1526 = vmax.f32 %v1522, %v1514
    %v1527 = vmax.f32 %v1523, %v1515
    %v1528 = vmax.f32 %v1524, %v1516
    %v1529 = vmax.f32 %v1525, %v1517
    %v1530 = vmax.f32 %v1526, %v1527
    %v1531 = vmax.f32 %v1528, %v1529
    %v1532 = vmax.f32 %v1530, %v1531
    %v1533 = vrot.slane %v1532, 4
    %v1534 = vmax.f32 %v1532, %v1533
    %v1535 = vrot.slane %v1534, 2
    %v1536 = vmax.f32 %v1534, %v1535
    %v1537 = vrot.slane %v1536, 1
    %v1538 = vmax.f32 %v1536, %v1537
    %1539 = vset.pattern.permute.xlu0 2
    %1540 = vperm.xlu0 %1539, %v1321
    %v1541 = vpop.permute.xlu0 %1540
    %1542 = vset.pattern.permute.xlu0 2
    %1543 = vperm.xlu0 %1542, %v1322
    %v1544 = vpop.permute.xlu0 %1543
    %1545 = vset.pattern.permute.xlu0 2
    %1546 = vperm.xlu0 %1545, %v1323
    %v1547 = vpop.permute.xlu0 %1546
    %1548 = vset.pattern.permute.xlu0 2
    %1549 = vperm.xlu0 %1548, %v1324
    %v1550 = vpop.permute.xlu0 %1549
    %1551 = vset.pattern.permute.xlu0 2
    %1552 = vperm.xlu0 %1551, %v1325
    %v1553 = vpop.permute.xlu0 %1552
    %1554 = vset.pattern.permute.xlu0 2
    %1555 = vperm.xlu0 %1554, %v1326
    %v1556 = vpop.permute.xlu0 %1555
    %1557 = vset.pattern.permute.xlu0 2
    %1558 = vperm.xlu0 %1557, %v1327
    %v1559 = vpop.permute.xlu0 %1558
    %1560 = vset.pattern.permute.xlu0 2
    %1561 = vperm.xlu0 %1560, %v1328
    %v1562 = vpop.permute.xlu0 %1561
    %1563 = vset.pattern.permute.xlu0 2
    %1564 = vperm.xlu0 %1563, %v1329
    %v1565 = vpop.permute.xlu0 %1564
    %1566 = vset.pattern.permute.xlu0 2
    %1567 = vperm.xlu0 %1566, %v1330
    %v1568 = vpop.permute.xlu0 %1567
    %1569 = vset.pattern.permute.xlu0 2
    %1570 = vperm.xlu0 %1569, %v1331
    %v1571 = vpop.permute.xlu0 %1570
    %1572 = vset.pattern.permute.xlu0 2
    %1573 = vperm.xlu0 %1572, %v1332
    %v1574 = vpop.permute.xlu0 %1573
    %1575 = vset.pattern.permute.xlu0 2
    %1576 = vperm.xlu0 %1575, %v1333
    %v1577 = vpop.permute.xlu0 %1576
    %1578 = vset.pattern.permute.xlu0 2
    %1579 = vperm.xlu0 %1578, %v1334
    %v1580 = vpop.permute.xlu0 %1579
    %1581 = vset.pattern.permute.xlu0 2
    %1582 = vperm.xlu0 %1581, %v1335
    %v1583 = vpop.permute.xlu0 %1582
    %1584 = vset.pattern.permute.xlu0 2
    %1585 = vperm.xlu0 %1584, %v1336
    %v1586 = vpop.permute.xlu0 %1585
    %vm1587 = vcmp.eq.s32.totalorder %v1541, 1
    %vm1588 = vcmp.eq.s32.totalorder %v1544, 1
    %vm1589 = vcmp.eq.s32.totalorder %v1547, 1
    %vm1590 = vcmp.eq.s32.totalorder %v1550, 1
    %vm1591 = vcmp.eq.s32.totalorder %v1553, 1
    %vm1592 = vcmp.eq.s32.totalorder %v1556, 1
    %vm1593 = vcmp.eq.s32.totalorder %v1559, 1
    %vm1594 = vcmp.eq.s32.totalorder %v1562, 1
    %vm1595 = vcmp.eq.s32.totalorder %v1565, 1
    %vm1596 = vcmp.eq.s32.totalorder %v1568, 1
    %vm1597 = vcmp.eq.s32.totalorder %v1571, 1
    %vm1598 = vcmp.eq.s32.totalorder %v1574, 1
    %vm1599 = vcmp.eq.s32.totalorder %v1577, 1
    %vm1600 = vcmp.eq.s32.totalorder %v1580, 1
    %vm1601 = vcmp.eq.s32.totalorder %v1583, 1
    %vm1602 = vcmp.eq.s32.totalorder %v1586, 1
    %v1603 = vsel %vm1587, %v1195, -1e+30
    %v1604 = vsel %vm1588, %v1196, -1e+30
    %v1605 = vsel %vm1589, %v1197, -1e+30
    %v1606 = vsel %vm1590, %v1198, -1e+30
    %v1607 = vsel %vm1591, %v1199, -1e+30
    %v1608 = vsel %vm1592, %v1200, -1e+30
    %v1609 = vsel %vm1593, %v1201, -1e+30
    %v1610 = vsel %vm1594, %v1202, -1e+30
    %v1611 = vsel %vm1595, %v1203, -1e+30
    %v1612 = vsel %vm1596, %v1204, -1e+30
    %v1613 = vsel %vm1597, %v1205, -1e+30
    %v1614 = vsel %vm1598, %v1206, -1e+30
    %v1615 = vsel %vm1599, %v1207, -1e+30
    %v1616 = vsel %vm1600, %v1208, -1e+30
    %v1617 = vsel %vm1601, %v1209, -1e+30
    %v1618 = vsel %vm1602, %v1210, -1e+30
    %v1619 = vmax.f32 %v1603, %v1607
    %v1620 = vmax.f32 %v1604, %v1608
    %v1621 = vmax.f32 %v1605, %v1609
    %v1622 = vmax.f32 %v1606, %v1610
    %v1623 = vmax.f32 %v1619, %v1611
    %v1624 = vmax.f32 %v1620, %v1612
    %v1625 = vmax.f32 %v1621, %v1613
    %v1626 = vmax.f32 %v1622, %v1614
    %v1627 = vmax.f32 %v1623, %v1615
    %v1628 = vmax.f32 %v1624, %v1616
    %v1629 = vmax.f32 %v1625, %v1617
    %v1630 = vmax.f32 %v1626, %v1618
    %v1631 = vmax.f32 %v1627, %v1628
    %v1632 = vmax.f32 %v1629, %v1630
    %v1633 = vmax.f32 %v1631, %v1632
    %v1634 = vrot.slane %v1633, 4
    %v1635 = vmax.f32 %v1633, %v1634
    %v1636 = vrot.slane %v1635, 2
    %v1637 = vmax.f32 %v1635, %v1636
    %v1638 = vrot.slane %v1637, 1
    %v1639 = vmax.f32 %v1637, %v1638
    %vm1640 = vcmask 1040384
    %v1641 = vsel %vm1640, %v1437, %v1538
    %vm1642 = vcmask 1041408
    %v1643 = vsel %vm1642, %v1641, %v1639
    %vm1644 = vcmask 1042432
    %v1645 = vsel %vm1644, %v1643, 0.0
    %vm1646 = vcmask 1043456
    %v1647 = vsel %vm1646, %v1645, 0.0
    %vm1648 = vcmask 1044480
    %v1649 = vsel %vm1648, %v1647, 0.0
    %vm1650 = vcmask 1045504
    %v1651 = vsel %vm1650, %v1649, 0.0
    %vm1652 = vcmask 1046528
    %v1653 = vsel %vm1652, %v1651, 0.0
    %v1654 = vld [vmem:[#allocation14] sm:$0xff]
    %v1655 = vld [vmem:[#allocation14 + $0x8] sm:$0xff]
    %v1656 = vld [vmem:[#allocation14 + $0x10] sm:$0xff]
    %v1657 = vld [vmem:[#allocation14 + $0x18] sm:$0xff]
    %v1658 = vld [vmem:[#allocation14 + $0x20] sm:$0xff]
    %v1659 = vld [vmem:[#allocation14 + $0x28] sm:$0xff]
    %v1660 = vld [vmem:[#allocation14 + $0x30] sm:$0xff]
    %v1661 = vld [vmem:[#allocation14 + $0x38] sm:$0xff]
    %v1662 = vld [vmem:[#allocation14 + $0x40] sm:$0xff]
    %v1663 = vld [vmem:[#allocation14 + $0x48] sm:$0xff]
    %v1664 = vld [vmem:[#allocation14 + $0x50] sm:$0xff]
    %v1665 = vld [vmem:[#allocation14 + $0x58] sm:$0xff]
    %v1666 = vld [vmem:[#allocation14 + $0x60] sm:$0xff]
    %v1667 = vld [vmem:[#allocation14 + $0x68] sm:$0xff]
    %v1668 = vld [vmem:[#allocation14 + $0x70] sm:$0xff]
    %v1669 = vld [vmem:[#allocation14 + $0x78] sm:$0xff]
    %v1670 = vld [vmem:[#allocation16] sm:$0xff]
    %v1671 = vld [vmem:[#allocation16 + $0x8] sm:$0xff]
    %v1672 = vld [vmem:[#allocation16 + $0x10] sm:$0xff]
    %v1673 = vld [vmem:[#allocation16 + $0x18] sm:$0xff]
    %v1674 = vld [vmem:[#allocation16 + $0x20] sm:$0xff]
    %v1675 = vld [vmem:[#allocation16 + $0x28] sm:$0xff]
    %v1676 = vld [vmem:[#allocation16 + $0x30] sm:$0xff]
    %v1677 = vld [vmem:[#allocation16 + $0x38] sm:$0xff]
    %v1678 = vld [vmem:[#allocation16 + $0x40] sm:$0xff]
    %v1679 = vld [vmem:[#allocation16 + $0x48] sm:$0xff]
    %v1680 = vld [vmem:[#allocation16 + $0x50] sm:$0xff]
    %v1681 = vld [vmem:[#allocation16 + $0x58] sm:$0xff]
    %v1682 = vld [vmem:[#allocation16 + $0x60] sm:$0xff]
    %v1683 = vld [vmem:[#allocation16 + $0x68] sm:$0xff]
    %v1684 = vld [vmem:[#allocation16 + $0x70] sm:$0xff]
    %v1685 = vld [vmem:[#allocation16 + $0x78] sm:$0xff]
    %1686 = vmatprep.subr.mxu0 0.0
    %1687 = vmatpush1.msra.mxu0 %v1685
    %1688 = vmatprep.subr.mxu0 0.0
    %1689 = vmatpush1.msra.mxu0 %v1684
    %1690 = vmatprep.subr.mxu0 0.0
    %1691 = vmatpush1.msra.mxu0 %v1683
    %1692 = vmatprep.subr.mxu0 0.0
    %1693 = vmatpush1.msra.mxu0 %v1682
    %1694 = vmatprep.subr.mxu0 0.0
    %1695 = vmatpush1.msra.mxu0 %v1681
    %1696 = vmatprep.subr.mxu0 0.0
    %1697 = vmatpush1.msra.mxu0 %v1680
    %1698 = vmatprep.subr.mxu0 0.0
    %1699 = vmatpush1.msra.mxu0 %v1679
    %1700 = vmatprep.subr.mxu0 0.0
    %1701 = vmatpush1.msra.mxu0 %v1678
    %1702 = vmatprep.subr.mxu0 0.0
    %1703 = vmatpush1.msra.mxu0 %v1677
    %1704 = vmatprep.subr.mxu0 0.0
    %1705 = vmatpush1.msra.mxu0 %v1676
    %1706 = vmatprep.subr.mxu0 0.0
    %1707 = vmatpush1.msra.mxu0 %v1675
    %1708 = vmatprep.subr.mxu0 0.0
    %1709 = vmatpush1.msra.mxu0 %v1674
    %1710 = vmatprep.subr.mxu0 0.0
    %1711 = vmatpush1.msra.mxu0 %v1673
    %1712 = vmatprep.subr.mxu0 0.0
    %1713 = vmatpush1.msra.mxu0 %v1672
    %1714 = vmatprep.subr.mxu0 0.0
    %1715 = vmatpush1.msra.mxu0 %v1671
    %1716 = vmatprep.subr.mxu0 0.0
    %1717 = vmatpush1.msra.mxu0 %v1670
    %1718 = vmatprep.subr.mxu0 0.0
    %1719 = vmatpush2.msra.mxu0 0.0
    %1720 = vmatprep.subr.mxu0 0.0
    %1721 = vmatpush2.msra.mxu0 0.0
    %1722 = vmatprep.subr.mxu0 0.0
    %1723 = vmatpush2.msra.mxu0 0.0
    %1724 = vmatprep.subr.mxu0 0.0
    %1725 = vmatpush2.msra.mxu0 0.0
    %1726 = vmatprep.subr.mxu0 0.0
    %1727 = vmatpush2.msra.mxu0 0.0
    %1728 = vmatprep.subr.mxu0 0.0
    %1729 = vmatpush2.msra.mxu0 0.0
    %1730 = vmatprep.subr.mxu0 0.0
    %1731 = vmatpush2.msra.mxu0 0.0
    %1732 = vmatprep.subr.mxu0 0.0
    %1733 = vmatpush2.msra.mxu0 0.0
    %1734 = vmatprep.subr.mxu0 0.0
    %1735 = vmatpush2.msra.mxu0 0.0
    %1736 = vmatprep.subr.mxu0 0.0
    %1737 = vmatpush2.msra.mxu0 0.0
    %1738 = vmatprep.subr.mxu0 0.0
    %1739 = vmatpush2.msra.mxu0 0.0
    %1740 = vmatprep.subr.mxu0 0.0
    %1741 = vmatpush2.msra.mxu0 0.0
    %1742 = vmatprep.subr.mxu0 0.0
    %1743 = vmatpush2.msra.mxu0 0.0
    %1744 = vmatprep.subr.mxu0 0.0
    %1745 = vmatpush2.msra.mxu0 0.0
    %1746 = vmatprep.subr.mxu0 0.0
    %1747 = vmatpush2.msra.mxu0 0.0
    %1748 = vmatprep.subr.mxu0 0.0
    %1749 = vmatpush2.msra.mxu0 0.0
    %1750 = vmatprep.mubr.f32.mxu0 0.0
    %1751 = vmatmul.mubr.f32.gmra.mxu0 %v1288
    %v1752 = vpop.f32.mrf.mxu0
    %v1753 = vadd.f32 0.0, %v1752
    %v1754 = vpop.f32.mrf.mxu0
    %1755 = vdwg.mxu0
    %1756 = vmatprep.subr.mxu0 0.0
    %1757 = vmatpush1.msra.mxu0 %v1669
    %1758 = vmatprep.subr.mxu0 0.0
    %1759 = vmatpush1.msra.mxu0 %v1668
    %1760 = vmatprep.subr.mxu0 0.0
    %1761 = vmatpush1.msra.mxu0 %v1667
    %1762 = vmatprep.subr.mxu0 0.0
    %1763 = vmatpush1.msra.mxu0 %v1666
    %1764 = vmatprep.subr.mxu0 0.0
    %1765 = vmatpush1.msra.mxu0 %v1665
    %1766 = vmatprep.subr.mxu0 0.0
    %1767 = vmatpush1.msra.mxu0 %v1664
    %1768 = vmatprep.subr.mxu0 0.0
    %1769 = vmatpush1.msra.mxu0 %v1663
    %1770 = vmatprep.subr.mxu0 0.0
    %1771 = vmatpush1.msra.mxu0 %v1662
    %1772 = vmatprep.subr.mxu0 0.0
    %1773 = vmatpush1.msra.mxu0 %v1661
    %1774 = vmatprep.subr.mxu0 0.0
    %1775 = vmatpush1.msra.mxu0 %v1660
    %1776 = vmatprep.subr.mxu0 0.0
    %1777 = vmatpush1.msra.mxu0 %v1659
    %1778 = vmatprep.subr.mxu0 0.0
    %1779 = vmatpush1.msra.mxu0 %v1658
    %1780 = vmatprep.subr.mxu0 0.0
    %1781 = vmatpush1.msra.mxu0 %v1657
    %1782 = vmatprep.subr.mxu0 0.0
    %1783 = vmatpush1.msra.mxu0 %v1656
    %1784 = vmatprep.subr.mxu0 0.0
    %1785 = vmatpush1.msra.mxu0 %v1655
    %1786 = vmatprep.subr.mxu0 0.0
    %1787 = vmatpush1.msra.mxu0 %v1654
    %1788 = vmatprep.subr.mxu0 0.0
    %1789 = vmatpush2.msra.mxu0 0.0
    %1790 = vmatprep.subr.mxu0 0.0
    %1791 = vmatpush2.msra.mxu0 0.0
    %1792 = vmatprep.subr.mxu0 0.0
    %1793 = vmatpush2.msra.mxu0 0.0
    %1794 = vmatprep.subr.mxu0 0.0
    %1795 = vmatpush2.msra.mxu0 0.0
    %1796 = vmatprep.subr.mxu0 0.0
    %1797 = vmatpush2.msra.mxu0 0.0
    %1798 = vmatprep.subr.mxu0 0.0
    %1799 = vmatpush2.msra.mxu0 0.0
    %1800 = vmatprep.subr.mxu0 0.0
    %1801 = vmatpush2.msra.mxu0 0.0
    %1802 = vmatprep.subr.mxu0 0.0
    %1803 = vmatpush2.msra.mxu0 0.0
    %1804 = vmatprep.subr.mxu0 0.0
    %1805 = vmatpush2.msra.mxu0 0.0
    %1806 = vmatprep.subr.mxu0 0.0
    %1807 = vmatpush2.msra.mxu0 0.0
    %1808 = vmatprep.subr.mxu0 0.0
    %1809 = vmatpush2.msra.mxu0 0.0
    %1810 = vmatprep.subr.mxu0 0.0
    %1811 = vmatpush2.msra.mxu0 0.0
    %1812 = vmatprep.subr.mxu0 0.0
    %1813 = vmatpush2.msra.mxu0 0.0
    %1814 = vmatprep.subr.mxu0 0.0
    %1815 = vmatpush2.msra.mxu0 0.0
    %1816 = vmatprep.subr.mxu0 0.0
    %1817 = vmatpush2.msra.mxu0 0.0
    %1818 = vmatprep.subr.mxu0 0.0
    %1819 = vmatpush2.msra.mxu0 0.0
    %1820 = vmatprep.mubr.f32.mxu0 0.0
    %1821 = vmatmul.mubr.f32.gmra.mxu0 %v1653
    %v1822 = vpop.f32.mrf.mxu0
    %v1823 = vadd.f32 %v1753, %v1822
    %v1824 = vpop.f32.mrf.mxu0
    %1825 = vdwg.mxu0
    %v1826 = vld [vmem:[#allocation17] sm:$0xff]
    %v1827 = vld [vmem:[#allocation17 + $0x8] sm:$0xff]
    %v1828 = vld [vmem:[#allocation17 + $0x10] sm:$0xff]
    %v1829 = vld [vmem:[#allocation17 + $0x18] sm:$0xff]
    %v1830 = vld [vmem:[#allocation17 + $0x20] sm:$0xff]
    %v1831 = vld [vmem:[#allocation17 + $0x28] sm:$0xff]
    %v1832 = vld [vmem:[#allocation17 + $0x30] sm:$0xff]
    %v1833 = vld [vmem:[#allocation17 + $0x38] sm:$0xff]
    %v1834 = vld [vmem:[#allocation17 + $0x40] sm:$0xff]
    %v1835 = vld [vmem:[#allocation17 + $0x48] sm:$0xff]
    %v1836 = vld [vmem:[#allocation17 + $0x50] sm:$0xff]
    %v1837 = vld [vmem:[#allocation17 + $0x58] sm:$0xff]
    %v1838 = vld [vmem:[#allocation17 + $0x60] sm:$0xff]
    %v1839 = vld [vmem:[#allocation17 + $0x68] sm:$0xff]
    %v1840 = vld [vmem:[#allocation17 + $0x70] sm:$0xff]
    %v1841 = vld [vmem:[#allocation17 + $0x78] sm:$0xff]
    %1842 = vmatprep.subr.mxu0 0.0
    %1843 = vmatpush1.msra.mxu0 %v1841
    %1844 = vmatprep.subr.mxu0 0.0
    %1845 = vmatpush1.msra.mxu0 %v1840
    %1846 = vmatprep.subr.mxu0 0.0
    %1847 = vmatpush1.msra.mxu0 %v1839
    %1848 = vmatprep.subr.mxu0 0.0
    %1849 = vmatpush1.msra.mxu0 %v1838
    %1850 = vmatprep.subr.mxu0 0.0
    %1851 = vmatpush1.msra.mxu0 %v1837
    %1852 = vmatprep.subr.mxu0 0.0
    %1853 = vmatpush1.msra.mxu0 %v1836
    %1854 = vmatprep.subr.mxu0 0.0
    %1855 = vmatpush1.msra.mxu0 %v1835
    %1856 = vmatprep.subr.mxu0 0.0
    %1857 = vmatpush1.msra.mxu0 %v1834
    %1858 = vmatprep.subr.mxu0 0.0
    %1859 = vmatpush1.msra.mxu0 %v1833
    %1860 = vmatprep.subr.mxu0 0.0
    %1861 = vmatpush1.msra.mxu0 %v1832
    %1862 = vmatprep.subr.mxu0 0.0
    %1863 = vmatpush1.msra.mxu0 %v1831
    %1864 = vmatprep.subr.mxu0 0.0
    %1865 = vmatpush1.msra.mxu0 %v1830
    %1866 = vmatprep.subr.mxu0 0.0
    %1867 = vmatpush1.msra.mxu0 %v1829
    %1868 = vmatprep.subr.mxu0 0.0
    %1869 = vmatpush1.msra.mxu0 %v1828
    %1870 = vmatprep.subr.mxu0 0.0
    %1871 = vmatpush1.msra.mxu0 %v1827
    %1872 = vmatprep.subr.mxu0 0.0
    %1873 = vmatpush1.msra.mxu0 %v1826
    %1874 = vmatprep.subr.mxu0 0.0
    %1875 = vmatpush2.msra.mxu0 0.0
    %1876 = vmatprep.subr.mxu0 0.0
    %1877 = vmatpush2.msra.mxu0 0.0
    %1878 = vmatprep.subr.mxu0 0.0
    %1879 = vmatpush2.msra.mxu0 0.0
    %1880 = vmatprep.subr.mxu0 0.0
    %1881 = vmatpush2.msra.mxu0 0.0
    %1882 = vmatprep.subr.mxu0 0.0
    %1883 = vmatpush2.msra.mxu0 0.0
    %1884 = vmatprep.subr.mxu0 0.0
    %1885 = vmatpush2.msra.mxu0 0.0
    %1886 = vmatprep.subr.mxu0 0.0
    %1887 = vmatpush2.msra.mxu0 0.0
    %1888 = vmatprep.subr.mxu0 0.0
    %1889 = vmatpush2.msra.mxu0 0.0
    %1890 = vmatprep.subr.mxu0 0.0
    %1891 = vmatpush2.msra.mxu0 0.0
    %1892 = vmatprep.subr.mxu0 0.0
    %1893 = vmatpush2.msra.mxu0 0.0
    %1894 = vmatprep.subr.mxu0 0.0
    %1895 = vmatpush2.msra.mxu0 0.0
    %1896 = vmatprep.subr.mxu0 0.0
    %1897 = vmatpush2.msra.mxu0 0.0
    %1898 = vmatprep.subr.mxu0 0.0
    %1899 = vmatpush2.msra.mxu0 0.0
    %1900 = vmatprep.subr.mxu0 0.0
    %1901 = vmatpush2.msra.mxu0 0.0
    %1902 = vmatprep.subr.mxu0 0.0
    %1903 = vmatpush2.msra.mxu0 0.0
    %1904 = vmatprep.subr.mxu0 0.0
    %1905 = vmatpush2.msra.mxu0 0.0
    %1906 = vmatprep.mubr.f32.mxu0 0.0
    %1907 = vmatmul.mubr.f32.gmra.mxu0 %v1279
    %v1908 = vpop.f32.mrf.mxu0
    %v1909 = vadd.f32 0.0, %v1908
    %v1910 = vpop.f32.mrf.mxu0
    %1911 = vdwg.mxu0
    %v1912 = vadd.f32 %v1823, %v1909
    %v1913 = vld [vmem:[%s12] sm:$0x1]
    %v1915 = vlaneseq
    %v1916 = vshrl.u32 %v1915, 7
    %v1917 = vsub.s32 0, %v1916
    %v1918 = vrot.slane %v1913, %v1917
    %v1920 = vadd.f32 %v1912, %v1918
    %1921 = vst [vmem:[#allocation19] sm:$0xff] %v1920
    // Predicated region
    $region94: #{tpu_custom_call.1} parent=1 // pred_check
      _
    $region95: #{tpu_custom_call.1} parent=1 // pred_check_branch
      %1923 = sbr.rel (0) target = $region97
    $region96: #{tpu_custom_call.1} parent=1 // pred_region
      %s1925 = ssub.s32 128, 128
      %1926 = vsyncadd [#allocation4], %s1925
      %s1928 = sshll.u32 [#allocation19], 4
      %s1929 = int_to_ptr.vmem [resolvable:$true] %s1928
      %1931 = dma.vmem_to_hbm [thread:$0]  %s1929, 128, %s13, [#allocation4]
    $region97: #{tpu_custom_call.1} parent=1 // pred_fallthru
      _
    // Predicated region
    $region98: #{tpu_custom_call.1} parent=1 // pred_check
      _
    $region99: #{tpu_custom_call.1} parent=1 // pred_check_branch
      %1933 = sbr.rel (0) target = $region101
    $region100: #{tpu_custom_call.1} parent=1 // pred_region
      %1934 = dma.done [#allocation4], 128
    $region101: #{tpu_custom_call.1} parent=1 // pred_fallthru
      _
    %1935 = vsyncpa [#allocation3], 1
    %1936 = vsyncpa [#allocation6], 1
    %1937 = vsyncpa [#allocation9], 1
    %1938 = vsyncpa [#allocation12], 1
    %1939 = vsyncpa [#allocation15], 1
    %1940 = vsyncpa [#allocation18], 1
    %1941 = vsyncpa [#allocation4], 1

</llo_original>
